<compile_context>
chip_gen: v6e
topology: v6e:2x2x1
jax: 0.10.0
libtpu: 0.0.40
codegen_flags: <defaults>
</compile_context>

<pallas_src>
import functools

import jax
import jax.numpy as jnp
from jax import lax
from jax.experimental import pallas as pl
from jax.experimental.pallas import tpu as pltpu


def _activation(y, negative_slope):
    # negative_slope is a compile-time Python float: 0.0 -> ReLU (single VPU max),
    # otherwise LeakyReLU (compare + mul + select).
    if negative_slope == 0.0:
        return jnp.maximum(y, 0.0)
    return jnp.where(y >= 0.0, y, negative_slope * y)


def atom_emb_kernel(nfeat_ref, atom_ref, p_ref, w1f_ref, w2t_ref, colsum2_ref,
                    o_ref, *, negative_slope, d_nfeat):
    eps = 1e-5

    # Lane-dense flattened atom block: (TM, A*F).
    x = atom_ref[...].astype(jnp.float32)

    # ---- InstanceNorm1d(F): per (node, atom) over the F features, via the block-
    #      averaging matrix P so no (TM, A, F) relayout / cross-lane reduction exists.
    #      (x @ P)[n, a*F+f'] == mean_f x[n, a*F+f]  (broadcast back over f'). ----
    mu_b = jnp.dot(x, p_ref[...], preferred_element_type=jnp.float32)
    cen = x - mu_b
    var_b = jnp.dot(cen * cen, p_ref[...], preferred_element_type=jnp.float32)  # biased
    xhat = cen * lax.rsqrt(var_b + eps)

    # ---- Linear(F, H, bias=False) + mean over atoms, folded into one (A*F, H) matrix
    #      w1f[a*F+f, h] = W1[h, f] / A.  bf16 MXU operands, f32 accumulation. ----
    y1 = jnp.dot(xhat.astype(jnp.bfloat16), w1f_ref[...],
                 preferred_element_type=jnp.float32)                    # (TM, H)
    h = _activation(y1, negative_slope)

    # ---- Linear(H, H, bias=False) with InstanceNorm1d(H) folded into its epilogue:
    #      norm(h) @ W2^T == r2 * (h @ W2^T - m2 * colsum(W2^T)); the bf16 MXU matmul
    #      starts immediately while the XLU mean/var reductions run alongside. ----
    g = jnp.dot(h.astype(jnp.bfloat16), w2t_ref[...],
                preferred_element_type=jnp.float32)                     # (TM, H)
    m2 = jnp.mean(h, axis=-1, keepdims=True)                            # (TM, 1)
    d2 = h - m2
    v2 = jnp.mean(d2 * d2, axis=-1, keepdims=True)                      # two-pass, biased
    r2 = lax.rsqrt(v2 + eps)
    y2 = r2 * (g - m2 * colsum2_ref[...])
    z = _activation(y2, negative_slope)

    # ---- feat = concat([nfeat, atom_emb], axis=-1): fused.  Dn and H are multiples
    #      of 128, so both halves are unmasked, lane-dense full-width stores. ----
    o_ref[:, :d_nfeat] = nfeat_ref[...].astype(o_ref.dtype)
    o_ref[:, d_nfeat:] = z.astype(o_ref.dtype)


def atom_emb_forward(nfeat, atom_emb, w1, w2, *, negative_slope=0.0, tile_m=256):
    """nfeat: (N, Dn); atom_emb: (N, A, F); w1: (H, F); w2: (H, H) -> (N, Dn + H) f32."""
    N, Dn = nfeat.shape
    N2, A, F = atom_emb.shape
    assert N2 == N
    H = w1.shape[0]
    assert w1.shape == (H, F) and w2.shape == (H, H)
    # Lane-aligned concat halves keep the output stores unmasked full-width vst.
    assert Dn % 128 == 0, "Dn must be a multiple of 128 for lane-dense concat stores"
    assert H % 128 == 0, "H must be a multiple of 128 for lane-dense stores"

    AF = A * F
    # Free view: (A, F) is contiguous per node, so this is just a flat reinterpretation.
    atom_flat = atom_emb.reshape(N, AF)

    # Block-averaging matrix: P[a*F+f, a'*F+f'] = 1/F if a == a' else 0.
    P = jnp.kron(jnp.eye(A, dtype=jnp.float32),
                 jnp.full((F, F), 1.0 / F, jnp.float32))                # (AF, AF)
    # Mean-over-atoms folded into the first (bias-free) linear.
    w1f = (jnp.tile(jnp.asarray(w1, jnp.float32).T, (A, 1)) / A).astype(jnp.bfloat16)
    w2t = jnp.asarray(w2, jnp.float32).T.astype(jnp.bfloat16)           # (H, H)
    # colsum of the *bf16* weights (what the MXU sees) keeps the folded-norm identity
    # consistent with the matmul: ones @ W2^T.
    colsum2 = jnp.sum(w2t.astype(jnp.float32), axis=0, keepdims=True)   # (1, H)

    d_out = Dn + H
    n_tiles = pl.cdiv(N, tile_m)   # no padding: ragged last block is masked by Pallas

    kernel = functools.partial(atom_emb_kernel,
                               negative_slope=float(negative_slope),
                               d_nfeat=int(Dn))

    return pl.pallas_call(
        kernel,
        out_shape=jax.ShapeDtypeStruct((N, d_out), jnp.float32),
        grid_spec=pltpu.PrefetchScalarGridSpec(
            num_scalar_prefetch=0,
            grid=(n_tiles,),
            in_specs=[
                pl.BlockSpec((tile_m, Dn), lambda i: (i, 0)),
                pl.BlockSpec((tile_m, AF), lambda i: (i, 0)),
                pl.BlockSpec((AF, AF), lambda i: (0, 0)),   # VMEM-resident weights
                pl.BlockSpec((AF, H), lambda i: (0, 0)),
                pl.BlockSpec((H, H), lambda i: (0, 0)),
                pl.BlockSpec((1, H), lambda i: (0, 0)),
            ],
            out_specs=pl.BlockSpec((tile_m, d_out), lambda i: (i, 0)),
        ),
        compiler_params=pltpu.CompilerParams(
            dimension_semantics=("parallel",),
        ),
    )(nfeat, atom_flat, P, w1f, w2t, colsum2)


def atom_emb_reference(nfeat, atom_emb, w1, w2, negative_slope=0.0):
    """Pure-JAX reference following the PyTorch op order exactly (f32, HIGHEST)."""
    eps = 1e-5
    hp = lax.Precision.HIGHEST
    x = atom_emb.astype(jnp.float32)                                   # (N, A, F)
    mu = jnp.mean(x, axis=-1, keepdims=True)                           # InstanceNorm1d(F)
    var = jnp.mean((x - mu) ** 2, axis=-1, keepdims=True)
    x = (x - mu) / jnp.sqrt(var + eps)
    y = jnp.einsum("naf,hf->nah", x, w1.astype(jnp.float32), precision=hp)  # Linear(F,H)
    y = jnp.mean(y, axis=1, keepdims=True)                             # (N, 1, H)
    y = jnp.where(y >= 0, y, negative_slope * y)                       # activation
    mu2 = jnp.mean(y, axis=-1, keepdims=True)                          # InstanceNorm1d(H)
    var2 = jnp.mean((y - mu2) ** 2, axis=-1, keepdims=True)
    y = ((y - mu2) / jnp.sqrt(var2 + eps))[:, 0, :]                    # .squeeze()
    y = jnp.dot(y, w2.astype(jnp.float32).T, precision=hp)             # Linear(H,H)
    y = jnp.where(y >= 0, y, negative_slope * y)
    return jnp.concatenate([nfeat.astype(jnp.float32), y], axis=-1)    # G.ndata['feat']


if __name__ == "__main__":
    # Shapes consistent with the module: N nodes, A atoms/node,
    # atom_emb_in=7 and atom_emb_h=256 (module defaults), Dn-wide node features.
    # N=1000 deliberately exercises the ragged last grid block (no wrapper padding).
    N, A, F = 1000, 14, 7
    H = 256
    Dn = 128

    key = jax.random.PRNGKey(0)
    k1, k2, k3, k4 = jax.random.split(key, 4)

    atom_emb = jax.random.normal(k1, (N, A, F), jnp.float32)
    nfeat = jax.random.normal(k2, (N, Dn), jnp.float32)
    # PyTorch-style Linear init (bias=False): uniform(+-1/sqrt(fan_in)).
    w1 = jax.random.uniform(k3, (H, F), jnp.float32, -1.0 / F ** 0.5, 1.0 / F ** 0.5)
    w2 = jax.random.uniform(k4, (H, H), jnp.float32, -1.0 / H ** 0.5, 1.0 / H ** 0.5)

    out = atom_emb_forward(nfeat, atom_emb, w1, w2)   # ReLU (constructor default)
    out = jax.block_until_ready(out)

    ref = atom_emb_reference(nfeat, atom_emb, w1, w2)
    assert out.shape == (N, Dn + H)
    # Tolerance allows for the bf16 MXU operands (intentional) and f32 MXU pass choices;
    # semantic errors would be orders of magnitude larger.
    assert jnp.allclose(out, ref, atol=2e-2, rtol=2e-2), "mismatch vs reference"

    print("KERNEL_OK")
</pallas_src>

<mosaic_0001>
module attributes {stable_mosaic.version = 11 : i64} {
  func.func @atom_emb_kernel(%arg0: i32, %arg1: memref<256x128xf32, #tpu.memory_space<vmem>>, %arg2: memref<256x98xf32, #tpu.memory_space<vmem>>, %arg3: memref<98x98xf32, #tpu.memory_space<vmem>>, %arg4: memref<98x256xbf16, #tpu.memory_space<vmem>>, %arg5: memref<256x256xbf16, #tpu.memory_space<vmem>>, %arg6: memref<1x256xf32, #tpu.memory_space<vmem>>, %arg7: memref<256x384xf32, #tpu.memory_space<vmem>>) attributes {dimension_semantics = [#tpu.dimension_semantics<parallel>], iteration_bounds = array<i64: 4>, scalar_prefetch = 0 : i64, scratch_operands = 0 : i64, tpu.core_type = #tpu.core_type<tc>, window_params = [{transform_indices = @transform_0, window_bounds = array<i64: 256, 128>}, {transform_indices = @transform_1, window_bounds = array<i64: 256, 98>}, {pipeline_mode = #tpu.pipeline_mode<synchronous>, transform_indices = @transform_2, window_bounds = array<i64: 98, 98>}, {pipeline_mode = #tpu.pipeline_mode<synchronous>, transform_indices = @transform_3, window_bounds = array<i64: 98, 256>}, {pipeline_mode = #tpu.pipeline_mode<synchronous>, transform_indices = @transform_4, window_bounds = array<i64: 256, 256>}, {pipeline_mode = #tpu.pipeline_mode<synchronous>, transform_indices = @transform_5, window_bounds = array<i64: 1, 256>}, {transform_indices = @transform_6, window_bounds = array<i64: 256, 384>}]} {
    %c0 = arith.constant 0 : index
    %c0_0 = arith.constant 0 : index
    %0 = vector.load %arg2[%c0, %c0_0] : memref<256x98xf32, #tpu.memory_space<vmem>>, vector<256x98xf32>
    %c0_1 = arith.constant 0 : index
    %c0_2 = arith.constant 0 : index
    %1 = vector.load %arg3[%c0_1, %c0_2] : memref<98x98xf32, #tpu.memory_space<vmem>>, vector<98x98xf32>
    %cst = arith.constant dense<0.000000e+00> : vector<256x98xf32>
    %2 = tpu.matmul %0, %1, %cst {dimension_numbers = #tpu.dot_dimension_numbers<[1], [0], [0], [1], [0, 0, 1, 1], [], []>} : vector<256x98xf32>, vector<98x98xf32>, vector<256x98xf32> -> vector<256x98xf32>
    %3 = arith.subf %0, %2 : vector<256x98xf32>
    %4 = arith.mulf %3, %3 : vector<256x98xf32>
    %c0_3 = arith.constant 0 : index
    %c0_4 = arith.constant 0 : index
    %5 = vector.load %arg3[%c0_3, %c0_4] : memref<98x98xf32, #tpu.memory_space<vmem>>, vector<98x98xf32>
    %cst_5 = arith.constant dense<0.000000e+00> : vector<256x98xf32>
    %6 = tpu.matmul %4, %5, %cst_5 {dimension_numbers = #tpu.dot_dimension_numbers<[1], [0], [0], [1], [0, 0, 1, 1], [], []>} : vector<256x98xf32>, vector<98x98xf32>, vector<256x98xf32> -> vector<256x98xf32>
    %cst_6 = arith.constant 9.99999974E-6 : f32
    %7 = vector.broadcast %cst_6 : f32 to vector<256x98xf32>
    %8 = arith.addf %6, %7 : vector<256x98xf32>
    %9 = math.rsqrt %8 : vector<256x98xf32>
    %10 = arith.mulf %3, %9 : vector<256x98xf32>
    %11 = arith.truncf %10 : vector<256x98xf32> to vector<256x98xbf16>
    %c0_7 = arith.constant 0 : index
    %c0_8 = arith.constant 0 : index
    %12 = vector.load %arg4[%c0_7, %c0_8] : memref<98x256xbf16, #tpu.memory_space<vmem>>, vector<98x256xbf16>
    %cst_9 = arith.constant dense<0.000000e+00> : vector<256x256xf32>
    %13 = tpu.matmul %11, %12, %cst_9 {dimension_numbers = #tpu.dot_dimension_numbers<[1], [0], [0], [1], [0, 0, 1, 1], [], []>} : vector<256x98xbf16>, vector<98x256xbf16>, vector<256x256xf32> -> vector<256x256xf32>
    %cst_10 = arith.constant 0.000000e+00 : f32
    %14 = vector.broadcast %cst_10 : f32 to vector<256x256xf32>
    %15 = arith.maximumf %13, %14 : vector<256x256xf32>
    %16 = arith.truncf %15 : vector<256x256xf32> to vector<256x256xbf16>
    %c0_11 = arith.constant 0 : index
    %c0_12 = arith.constant 0 : index
    %17 = vector.load %arg5[%c0_11, %c0_12] : memref<256x256xbf16, #tpu.memory_space<vmem>>, vector<256x256xbf16>
    %cst_13 = arith.constant dense<0.000000e+00> : vector<256x256xf32>
    %18 = tpu.matmul %16, %17, %cst_13 {dimension_numbers = #tpu.dot_dimension_numbers<[1], [0], [0], [1], [0, 0, 1, 1], [], []>} : vector<256x256xbf16>, vector<256x256xbf16>, vector<256x256xf32> -> vector<256x256xf32>
    %cst_14 = arith.constant dense<0.000000e+00> : vector<256xf32>
    %19 = vector.multi_reduction <add>, %15, %cst_14 [1] : vector<256x256xf32> to vector<256xf32>
    %20 = vector.shape_cast %19 : vector<256xf32> to vector<256x1xf32>
    %cst_15 = arith.constant 2.560000e+02 : f32
    %21 = vector.broadcast %cst_15 : f32 to vector<256x1xf32>
    %22 = arith.divf %20, %21 : vector<256x1xf32>
    %23 = vector.broadcast %22 : vector<256x1xf32> to vector<256x256xf32>
    %24 = arith.subf %15, %23 : vector<256x256xf32>
    %25 = arith.mulf %24, %24 : vector<256x256xf32>
    %cst_16 = arith.constant dense<0.000000e+00> : vector<256xf32>
    %26 = vector.multi_reduction <add>, %25, %cst_16 [1] : vector<256x256xf32> to vector<256xf32>
    %27 = vector.shape_cast %26 : vector<256xf32> to vector<256x1xf32>
    %cst_17 = arith.constant 2.560000e+02 : f32
    %28 = vector.broadcast %cst_17 : f32 to vector<256x1xf32>
    %29 = arith.divf %27, %28 : vector<256x1xf32>
    %cst_18 = arith.constant 9.99999974E-6 : f32
    %30 = vector.broadcast %cst_18 : f32 to vector<256x1xf32>
    %31 = arith.addf %29, %30 : vector<256x1xf32>
    %32 = math.rsqrt %31 : vector<256x1xf32>
    %c0_19 = arith.constant 0 : index
    %c0_20 = arith.constant 0 : index
    %33 = vector.load %arg6[%c0_19, %c0_20] : memref<1x256xf32, #tpu.memory_space<vmem>>, vector<1x256xf32>
    %34 = vector.broadcast %22 : vector<256x1xf32> to vector<256x256xf32>
    %35 = vector.broadcast %33 : vector<1x256xf32> to vector<256x256xf32>
    %36 = arith.mulf %34, %35 : vector<256x256xf32>
    %37 = arith.subf %18, %36 : vector<256x256xf32>
    %38 = vector.broadcast %32 : vector<256x1xf32> to vector<256x256xf32>
    %39 = arith.mulf %38, %37 : vector<256x256xf32>
    %cst_21 = arith.constant 0.000000e+00 : f32
    %40 = vector.broadcast %cst_21 : f32 to vector<256x256xf32>
    %41 = arith.maximumf %39, %40 : vector<256x256xf32>
    %c0_22 = arith.constant 0 : index
    %c0_23 = arith.constant 0 : index
    %42 = vector.load %arg1[%c0_22, %c0_23] : memref<256x128xf32, #tpu.memory_space<vmem>>, vector<256x128xf32>
    %c0_24 = arith.constant 0 : index
    %c0_25 = arith.constant 0 : index
    %43 = vector.load %arg7[%c0_24, %c0_25] : memref<256x384xf32, #tpu.memory_space<vmem>>, vector<256x128xf32>
    tpu.vector_store %arg7[%c0_24, %c0_25], %42 {strides = array<i32>} : memref<256x384xf32, #tpu.memory_space<vmem>>, vector<256x128xf32>,
    %c0_26 = arith.constant 0 : index
    %c128 = arith.constant 128 : index
    %44 = vector.load %arg7[%c0_26, %c128] : memref<256x384xf32, #tpu.memory_space<vmem>>, vector<256x256xf32>
    tpu.vector_store %arg7[%c0_26, %c128], %41 {strides = array<i32>} : memref<256x384xf32, #tpu.memory_space<vmem>>, vector<256x256xf32>,
    return
  }
  func.func @transform_0(%arg0: i32) -> (i32, i32) {
    %c0_i32 = arith.constant 0 : i32
    %c0_i32_0 = arith.constant 0 : i32
    return %arg0, %c0_i32 : i32, i32
  }
  func.func @transform_1(%arg0: i32) -> (i32, i32) {
    %c0_i32 = arith.constant 0 : i32
    %c0_i32_0 = arith.constant 0 : i32
    return %arg0, %c0_i32 : i32, i32
  }
  func.func @transform_2(%arg0: i32) -> (i32, i32) {
    %c0_i32 = arith.constant 0 : i32
    %c0_i32_0 = arith.constant 0 : i32
    %c0_i32_1 = arith.constant 0 : i32
    return %c0_i32, %c0_i32_0 : i32, i32
  }
  func.func @transform_3(%arg0: i32) -> (i32, i32) {
    %c0_i32 = arith.constant 0 : i32
    %c0_i32_0 = arith.constant 0 : i32
    %c0_i32_1 = arith.constant 0 : i32
    return %c0_i32, %c0_i32_0 : i32, i32
  }
  func.func @transform_4(%arg0: i32) -> (i32, i32) {
    %c0_i32 = arith.constant 0 : i32
    %c0_i32_0 = arith.constant 0 : i32
    %c0_i32_1 = arith.constant 0 : i32
    return %c0_i32, %c0_i32_0 : i32, i32
  }
  func.func @transform_5(%arg0: i32) -> (i32, i32) {
    %c0_i32 = arith.constant 0 : i32
    %c0_i32_0 = arith.constant 0 : i32
    %c0_i32_1 = arith.constant 0 : i32
    return %c0_i32, %c0_i32_0 : i32, i32
  }
  func.func @transform_6(%arg0: i32) -> (i32, i32) {
    %c0_i32 = arith.constant 0 : i32
    %c0_i32_0 = arith.constant 0 : i32
    return %arg0, %c0_i32 : i32, i32
  }
}

</mosaic_0001>

<llo_original>
// kernel: tpu_custom_call.1
$region0: #{tpu_custom_call.1}
  #allocation0 [shape = 'u32[]', space=smem, size = 0x4, offset = 0x4, fixed_abs, tag = 'smem constant byte address 0x4 - core index']
  #allocation1 [shape = 'u32[144,128]{1,0:T(1,128)}', space=vmem, size = 0x12000, scoped, tag = 'internal scratch']
  %s0 = inlined_call_operand.hbm [shape: f32[1000,128], index: 0, kind: input, shape index: {}]
  %s1 = inlined_call_operand.vmem [shape: f32[1000,98], index: 1, kind: input, shape index: {}]
  %s2 = inlined_call_operand.hbm [shape: f32[98,98], index: 2, kind: input, shape index: {}]
  %s3 = inlined_call_operand.hbm [shape: bf16[98,256], index: 3, kind: input, shape index: {}]
  %s4 = inlined_call_operand.hbm [shape: bf16[256,256], index: 4, kind: input, shape index: {}]
  %s5 = inlined_call_operand.hbm [shape: f32[1,256], index: 5, kind: input, shape index: {}]
  %s6 = inlined_call_operand.hbm [shape: f32[1000,384], index: 6, kind: output, shape index: {}]
  %s7 = sld [smem:[#allocation0]]
  $region77: #{tpu_custom_call.1} parent=0
    _
  %s9 = ssub.s32 1, %s7
  %s10 = scalar_select 0, %s9, %s7
  $region1: #{tpu_custom_call.1} parent=0
    #allocation2 [shape = 'u8[262144]{0}', space=vmem, size = 0x40000, scoped, tag = 'input window, operand 0']
    #allocation3 [shape = 's32[2]{0}', space=sflag, size = 0x8, scoped, tag = 'scoped memory for tpu_custom_call.1']
    #allocation4 [shape = 's32[2]{0}', space=sflag, size = 0x8, scoped, tag = 'scoped memory for tpu_custom_call.1']
    #allocation5 [shape = 'u8[53248]{0}', space=vmem, size = 0xd000, scoped, tag = 'input window, operand 2, single buffered']
    #allocation6 [shape = 's32[1]{0}', space=sflag, size = 0x4, scoped, tag = 'scoped memory for tpu_custom_call.1']
    #allocation7 [shape = 'u8[53248]{0}', space=vmem, size = 0xd000, scoped, tag = 'input window, operand 3, single buffered']
    #allocation8 [shape = 'u8[131072]{0}', space=vmem, size = 0x20000, scoped, tag = 'input window, operand 4, single buffered']
    #allocation9 [shape = 's32[1]{0}', space=sflag, size = 0x4, scoped, tag = 'scoped memory for tpu_custom_call.1']
    #allocation10 [shape = 'u8[1024]{0}', space=vmem, size = 0x400, scoped, tag = 'input window, operand 5, single buffered']
    #allocation11 [shape = 'u8[786432]{0}', space=vmem, size = 0xc0000, scoped, tag = 'output window, operand 0']
    %11 = vsyncpa [#allocation3], 0
    %s12 = scalar_lea.sflag [#allocation3], 1
    %13 = vsyncpa %s12, 0
    %14 = vsyncpa [#allocation6], 0
    %15 = vsyncpa [#allocation9], 0
    %16 = vsyncpa [#allocation4], 0
    %s17 = scalar_lea.sflag [#allocation4], 1
    %18 = vsyncpa %s17, 0
    loop: start=0, step=1, limit=6
    $region2: #{tpu_custom_call.1} parent=1 // loop_pre_header
      _
    $region3: #{tpu_custom_call.1} parent=1 // loop_header
      %s20 = sphi 0, %s24
      %p21 = scmp.ge.s32.totalorder %s20, 6
      %s30 = sphi 0, %s32
      %s33 = sphi 0, %s30
      %s34 = sphi 0, %s33
      %s50 = sphi 0, %s34
      %s56 = sphi 0, %s58
      %s59 = sphi 0, %s56
      %s60 = sphi 0, %s59
      %s76 = sphi 0, %s60
      %s80 = sphi 0, %s80
      %s82 = sphi 0, %s80
      %s83 = sphi 0, %s82
      %s97 = sphi 0, %s83
      %s101 = sphi 0, %s101
      %s103 = sphi 0, %s101
      %s104 = sphi 0, %s103
      %s118 = sphi 0, %s104
      %s122 = sphi 0, %s122
      %s124 = sphi 0, %s122
      %s125 = sphi 0, %s124
      %s139 = sphi 0, %s125
      %s143 = sphi 0, %s143
      %s145 = sphi 0, %s143
      %s146 = sphi 0, %s145
      %s160 = sphi 0, %s146
      %s166 = sphi 0, %s168
      %s169 = sphi 0, %s166
      %s170 = sphi 0, %s169
      %s186 = sphi 0, %s170
    $region4: #{tpu_custom_call.1} parent=1 // loop_header_branch
      %23 = sbr.rel (%p21) target = $region8
    $region5: #{tpu_custom_call.1} parent=1 // loop_body
      %s25 = ssub.s32 %s20, 1
      %s26 = ssub.s32 %s20, 2
      %s27 = sadd.s32 %s20, 1
      %s28 = ssub.s32 %s20, %s27
      %p29 = scmp.eq.s32.totalorder %s28, 0
      %s31 = sadd.s32 %s30, 1
      %s32 = scalar_select %p29, %s30, %s31
      %p35 = pneg %p29
      %p36 = scmp.eq.s32.totalorder %s20, 3
      %p37 = por %p35, %p36
      %p38 = scmp.ne.s32.totalorder %s30, %s33
      %p39 = scmp.eq.s32.totalorder %s20, 0
      %p40 = por %p38, %p39
      %p41 = scmp.ne.s32.totalorder %s30, %s33
      %p42 = scmp.eq.s32.totalorder %s25, 3
      %p43 = por %p41, %p42
      %p44 = scmp.ne.s32.totalorder %s33, %s34
      %p45 = scmp.eq.s32.totalorder %s25, 0
      %p46 = por %p44, %p45
      %p47 = scmp.ne.s32.totalorder %s33, %s34
      %p48 = scmp.eq.s32.totalorder %s26, 3
      %p49 = por %p47, %p48
      %p51 = scmp.ne.s32.totalorder %s34, %s50
      %p52 = scmp.eq.s32.totalorder %s26, 0
      %p53 = por %p51, %p52
      %s54 = ssub.s32 %s20, %s27
      %p55 = scmp.eq.s32.totalorder %s54, 0
      %s57 = sadd.s32 %s56, 1
      %s58 = scalar_select %p55, %s56, %s57
      %p61 = pneg %p55
      %p62 = scmp.eq.s32.totalorder %s20, 3
      %p63 = por %p61, %p62
      %p64 = scmp.ne.s32.totalorder %s56, %s59
      %p65 = scmp.eq.s32.totalorder %s20, 0
      %p66 = por %p64, %p65
      %p67 = scmp.ne.s32.totalorder %s56, %s59
      %p68 = scmp.eq.s32.totalorder %s25, 3
      %p69 = por %p67, %p68
      %p70 = scmp.ne.s32.totalorder %s59, %s60
      %p71 = scmp.eq.s32.totalorder %s25, 0
      %p72 = por %p70, %p71
      %p73 = scmp.ne.s32.totalorder %s59, %s60
      %p74 = scmp.eq.s32.totalorder %s26, 3
      %p75 = por %p73, %p74
      %p77 = scmp.ne.s32.totalorder %s60, %s76
      %p78 = scmp.eq.s32.totalorder %s26, 0
      %p79 = por %p77, %p78
      %s81 = sadd.s32 %s80, 1
      %p84 = scmp.eq.s32.totalorder %s20, 3
      %p85 = scmp.ne.s32.totalorder %s80, %s82
      %p86 = scmp.eq.s32.totalorder %s20, 0
      %p87 = por %p85, %p86
      %p88 = scmp.ne.s32.totalorder %s80, %s82
      %p89 = scmp.eq.s32.totalorder %s25, 3
      %p90 = por %p88, %p89
      %p91 = scmp.ne.s32.totalorder %s82, %s83
      %p92 = scmp.eq.s32.totalorder %s25, 0
      %p93 = por %p91, %p92
      %p94 = scmp.ne.s32.totalorder %s82, %s83
      %p95 = scmp.eq.s32.totalorder %s26, 3
      %p96 = por %p94, %p95
      %p98 = scmp.ne.s32.totalorder %s83, %s97
      %p99 = scmp.eq.s32.totalorder %s26, 0
      %p100 = por %p98, %p99
      %s102 = sadd.s32 %s101, 1
      %p105 = scmp.eq.s32.totalorder %s20, 3
      %p106 = scmp.ne.s32.totalorder %s101, %s103
      %p107 = scmp.eq.s32.totalorder %s20, 0
      %p108 = por %p106, %p107
      %p109 = scmp.ne.s32.totalorder %s101, %s103
      %p110 = scmp.eq.s32.totalorder %s25, 3
      %p111 = por %p109, %p110
      %p112 = scmp.ne.s32.totalorder %s103, %s104
      %p113 = scmp.eq.s32.totalorder %s25, 0
      %p114 = por %p112, %p113
      %p115 = scmp.ne.s32.totalorder %s103, %s104
      %p116 = scmp.eq.s32.totalorder %s26, 3
      %p117 = por %p115, %p116
      %p119 = scmp.ne.s32.totalorder %s104, %s118
      %p120 = scmp.eq.s32.totalorder %s26, 0
      %p121 = por %p119, %p120
      %s123 = sadd.s32 %s122, 1
      %p126 = scmp.eq.s32.totalorder %s20, 3
      %p127 = scmp.ne.s32.totalorder %s122, %s124
      %p128 = scmp.eq.s32.totalorder %s20, 0
      %p129 = por %p127, %p128
      %p130 = scmp.ne.s32.totalorder %s122, %s124
      %p131 = scmp.eq.s32.totalorder %s25, 3
      %p132 = por %p130, %p131
      %p133 = scmp.ne.s32.totalorder %s124, %s125
      %p134 = scmp.eq.s32.totalorder %s25, 0
      %p135 = por %p133, %p134
      %p136 = scmp.ne.s32.totalorder %s124, %s125
      %p137 = scmp.eq.s32.totalorder %s26, 3
      %p138 = por %p136, %p137
      %p140 = scmp.ne.s32.totalorder %s125, %s139
      %p141 = scmp.eq.s32.totalorder %s26, 0
      %p142 = por %p140, %p141
      %s144 = sadd.s32 %s143, 1
      %p147 = scmp.eq.s32.totalorder %s20, 3
      %p148 = scmp.ne.s32.totalorder %s143, %s145
      %p149 = scmp.eq.s32.totalorder %s20, 0
      %p150 = por %p148, %p149
      %p151 = scmp.ne.s32.totalorder %s143, %s145
      %p152 = scmp.eq.s32.totalorder %s25, 3
      %p153 = por %p151, %p152
      %p154 = scmp.ne.s32.totalorder %s145, %s146
      %p155 = scmp.eq.s32.totalorder %s25, 0
      %p156 = por %p154, %p155
      %p157 = scmp.ne.s32.totalorder %s145, %s146
      %p158 = scmp.eq.s32.totalorder %s26, 3
      %p159 = por %p157, %p158
      %p161 = scmp.ne.s32.totalorder %s146, %s160
      %p162 = scmp.eq.s32.totalorder %s26, 0
      %p163 = por %p161, %p162
      %s164 = ssub.s32 %s20, %s27
      %p165 = scmp.eq.s32.totalorder %s164, 0
      %s167 = sadd.s32 %s166, 1
      %s168 = scalar_select %p165, %s166, %s167
      %p171 = pneg %p165
      %p172 = scmp.eq.s32.totalorder %s20, 3
      %p173 = por %p171, %p172
      %p174 = scmp.ne.s32.totalorder %s166, %s169
      %p175 = scmp.eq.s32.totalorder %s20, 0
      %p176 = por %p174, %p175
      %p177 = scmp.ne.s32.totalorder %s166, %s169
      %p178 = scmp.eq.s32.totalorder %s25, 3
      %p179 = por %p177, %p178
      %p180 = scmp.ne.s32.totalorder %s169, %s170
      %p181 = scmp.eq.s32.totalorder %s25, 0
      %p182 = por %p180, %p181
      %p183 = scmp.ne.s32.totalorder %s169, %s170
      %p184 = scmp.eq.s32.totalorder %s26, 3
      %p185 = por %p183, %p184
      %p187 = scmp.ne.s32.totalorder %s170, %s186
      %p188 = scmp.eq.s32.totalorder %s26, 0
      %p189 = por %p187, %p188
      %p190 = scmp.le.s32.totalorder 1, %s20
      %p191 = scmp.lt.s32.totalorder %s20, 5
      %p192 = pnand %p190, %p191
      %p193 = pneg %p192
      // Predicated region
      $region9: #{tpu_custom_call.1} parent=5 // pred_check
        _
      $region10: #{tpu_custom_call.1} parent=5 // pred_check_branch
        %195 = sbr.rel (%p192) target = $region12
      $region11: #{tpu_custom_call.1} parent=5 // pred_region
        %s196 = ssub.s32 %s20, 1
        // Predicated region
        $region13: #{tpu_custom_call.1} parent=11 // pred_check
          %p197 = pneg %p93
        $region14: #{tpu_custom_call.1} parent=11 // pred_check_branch
          %199 = sbr.rel (%p197) target = $region16
        $region15: #{tpu_custom_call.1} parent=11 // pred_region
          %s201 = ssub.s32 1664, 1664
          %202 = vsyncadd [#allocation6], %s201
          %s203 = sshll.u32 [#allocation5], 4
          %s204 = int_to_ptr.vmem [resolvable:$true] %s203
          %209 = dma.hbm_to_vmem [thread:$0]  %s2, 1664, %s204, [#allocation6], 128, 128, 8
        $region16: #{tpu_custom_call.1} parent=11 // pred_fallthru
          _
        // Predicated region
        $region17: #{tpu_custom_call.1} parent=11 // pred_check
          %p210 = pneg %p114
        $region18: #{tpu_custom_call.1} parent=11 // pred_check_branch
          %212 = sbr.rel (%p210) target = $region20
        $region19: #{tpu_custom_call.1} parent=11 // pred_region
          %s214 = ssub.s32 1664, 1664
          %215 = vsyncadd [#allocation6], %s214
          %s216 = sshll.u32 [#allocation7], 4
          %s217 = int_to_ptr.vmem [resolvable:$true] %s216
          %222 = dma.hbm_to_vmem [thread:$0]  %s3, 1664, %s217, [#allocation6], 128, 128, 8
        $region20: #{tpu_custom_call.1} parent=11 // pred_fallthru
          _
        // Predicated region
        $region21: #{tpu_custom_call.1} parent=11 // pred_check
          %p223 = pneg %p135
        $region22: #{tpu_custom_call.1} parent=11 // pred_check_branch
          %225 = sbr.rel (%p223) target = $region24
        $region23: #{tpu_custom_call.1} parent=11 // pred_region
          %s227 = ssub.s32 4096, 4096
          %228 = vsyncadd [#allocation9], %s227
          %s229 = sshll.u32 [#allocation8], 4
          %s230 = int_to_ptr.vmem [resolvable:$true] %s229
          %235 = dma.hbm_to_vmem [thread:$0]  %s4, 4096, %s230, [#allocation9], 128, 128, 8
        $region24: #{tpu_custom_call.1} parent=11 // pred_fallthru
          _
        // Predicated region
        $region25: #{tpu_custom_call.1} parent=11 // pred_check
          %p236 = pneg %p156
        $region26: #{tpu_custom_call.1} parent=11 // pred_check_branch
          %238 = sbr.rel (%p236) target = $region28
        $region27: #{tpu_custom_call.1} parent=11 // pred_region
          %s240 = ssub.s32 32, 32
          %241 = vsyncadd [#allocation9], %s240
          %s243 = sshll.u32 [#allocation10], 4
          %s244 = int_to_ptr.vmem [resolvable:$true] %s243
          %246 = dma.hbm_to_vmem [thread:$0]  %s5, 32, %s244, [#allocation9]
        $region28: #{tpu_custom_call.1} parent=11 // pred_fallthru
          _
      $region12: #{tpu_custom_call.1} parent=5 // pred_fallthru
        _
      %p247 = scmp.lt.s32.totalorder %s20, 4
      // Predicated region
      $region29: #{tpu_custom_call.1} parent=5 // pred_check
        %p248 = pneg %p247
      $region30: #{tpu_custom_call.1} parent=5 // pred_check_branch
        %250 = sbr.rel (%p248) target = $region32
      $region31: #{tpu_custom_call.1} parent=5 // pred_region
        // Predicated region
        $region33: #{tpu_custom_call.1} parent=31 // pred_check
          %p251 = pneg %p40
        $region34: #{tpu_custom_call.1} parent=31 // pred_check_branch
          %253 = sbr.rel (%p251) target = $region36
        $region35: #{tpu_custom_call.1} parent=31 // pred_region
          %s254 = sand.u32 %s30, 1
          %s255 = scalar_lea.sflag [#allocation3], %s254
          %s256 = sand.u32 %s30, 1
          %s257 = smul.addr %s256, 256
          %s258 = scalar_lea.vmem [#allocation2], %s257
          %s259 = smul.u32 32, %s20
          %s260 = ssub.s32 125, %s259
          %p261 = scmp.lt.s32.totalorder %s260, 32
          %s262 = scalar_select %p261, %s260, 32
          %s263 = smul.u32 128, %s262
          %s265 = ssub.s32 4096, %s263
          %266 = vsyncadd %s255, %s265
          %p267 = scmp.ne.s32.totalorder 0, %s263
          %s268 = smul.addr %s259, 128
          %s269 = scalar_lea.hbm %s0, %s268
          %s270 = smul.u32 8, %s262
          %s271 = sshll.u32 %s258, 4
          %s272 = int_to_ptr.vmem [resolvable:$true] %s271
          %s273 = sshll.u32 %s270, 4
          %277 = dma.hbm_to_vmem [thread:$0]  (%p267), %s269, %s273, %s272, %s255, 128, 128, 8
        $region36: #{tpu_custom_call.1} parent=31 // pred_fallthru
          _
        // Predicated region
        $region37: #{tpu_custom_call.1} parent=31 // pred_check
          %p278 = pneg %p66
        $region38: #{tpu_custom_call.1} parent=31 // pred_check_branch
          %280 = sbr.rel (%p278) target = $region40
        $region39: #{tpu_custom_call.1} parent=31 // pred_region
          %s281 = smul.u32 32, %s20
          %s282 = ssub.s32 125, %s281
          %p283 = scmp.lt.s32.totalorder %s282, 32
          %s284 = scalar_select %p283, %s282, 32
          %s285 = smul.u32 128, %s284
          %p286 = scmp.lt.s32.totalorder %s281, 124
          %s287 = scalar_select %p286, %s281, 124
          %s288 = smul.addr %s287, 8
          %s289 = scalar_lea.vmem %s1, %s288
          %s290 = smul.u32 32, %s20
          %s291 = ssub.s32 125, %s290
          %p292 = scmp.lt.s32.totalorder %s291, 32
          %s293 = scalar_select %p292, %s291, 32
          %s294 = smul.u32 128, %s293
        $region40: #{tpu_custom_call.1} parent=31 // pred_fallthru
          _
      $region32: #{tpu_custom_call.1} parent=5 // pred_fallthru
        _
      %p295 = scmp.le.s32.totalorder 1, %s20
      %p296 = scmp.lt.s32.totalorder %s20, 5
      %p297 = pnand %p295, %p296
      %p298 = pneg %p297
      // Predicated region
      $region41: #{tpu_custom_call.1} parent=5 // pred_check
        _
      $region42: #{tpu_custom_call.1} parent=5 // pred_check_branch
        %300 = sbr.rel (%p297) target = $region44
      $region43: #{tpu_custom_call.1} parent=5 // pred_region
        %s301 = ssub.s32 %s20, 1
        %s302 = sand.u32 %s33, 1
        %s303 = scalar_lea.sflag [#allocation3], %s302
        %s304 = sand.u32 %s33, 1
        %s305 = smul.addr %s304, 256
        %s306 = scalar_lea.vmem [#allocation2], %s305
        // Predicated region
        $region45: #{tpu_custom_call.1} parent=43 // pred_check
          %p307 = pneg %p46
        $region46: #{tpu_custom_call.1} parent=43 // pred_check_branch
          %309 = sbr.rel (%p307) target = $region48
        $region47: #{tpu_custom_call.1} parent=43 // pred_region
          %310 = dma.done %s303, 4096
        $region48: #{tpu_custom_call.1} parent=43 // pred_fallthru
          _
        // Predicated region
        $region49: #{tpu_custom_call.1} parent=43 // pred_check
          %p311 = pneg %p93
        $region50: #{tpu_custom_call.1} parent=43 // pred_check_branch
          %313 = sbr.rel (%p311) target = $region52
        $region51: #{tpu_custom_call.1} parent=43 // pred_region
          %314 = dma.done [#allocation6], 1664
        $region52: #{tpu_custom_call.1} parent=43 // pred_fallthru
          _
        // Predicated region
        $region53: #{tpu_custom_call.1} parent=43 // pred_check
          %p315 = pneg %p114
        $region54: #{tpu_custom_call.1} parent=43 // pred_check_branch
          %317 = sbr.rel (%p315) target = $region56
        $region55: #{tpu_custom_call.1} parent=43 // pred_region
          %318 = dma.done [#allocation6], 1664
        $region56: #{tpu_custom_call.1} parent=43 // pred_fallthru
          _
        // Predicated region
        $region57: #{tpu_custom_call.1} parent=43 // pred_check
          %p319 = pneg %p135
        $region58: #{tpu_custom_call.1} parent=43 // pred_check_branch
          %321 = sbr.rel (%p319) target = $region60
        $region59: #{tpu_custom_call.1} parent=43 // pred_region
          %322 = dma.done [#allocation9], 4096
        $region60: #{tpu_custom_call.1} parent=43 // pred_fallthru
          _
        // Predicated region
        $region61: #{tpu_custom_call.1} parent=43 // pred_check
          %p323 = pneg %p156
        $region62: #{tpu_custom_call.1} parent=43 // pred_check_branch
          %325 = sbr.rel (%p323) target = $region64
        $region63: #{tpu_custom_call.1} parent=43 // pred_region
          %326 = dma.done [#allocation9], 32
        $region64: #{tpu_custom_call.1} parent=43 // pred_fallthru
          _
        %s327 = sand.u32 %s33, 1
        %s328 = scalar_lea.sflag [#allocation3], %s327
        %s329 = sand.u32 %s33, 1
        %s330 = smul.addr %s329, 256
        %s331 = scalar_lea.vmem [#allocation2], %s330
        %p332 = pneg %p46
        %p333 = pneg %p43
        %s334 = smul.u32 32, %s25
        %s335 = ssub.s32 125, %s334
        %p336 = scmp.lt.s32.totalorder %s335, 32
        %s337 = scalar_select %p336, %s335, 32
        %s338 = smul.u32 128, %s337
        %p339 = scmp.lt.s32.totalorder %s334, 124
        %s340 = scalar_select %p339, %s334, 124
        %s341 = smul.addr %s340, 8
        %s342 = scalar_lea.vmem %s1, %s341
        %p343 = pneg %p72
        %p344 = pneg %p69
        %p345 = pneg %p93
        %p346 = pneg %p90
        %p347 = pneg %p114
        %p348 = pneg %p111
        %p349 = pneg %p135
        %p350 = pneg %p132
        %p351 = pneg %p156
        %p352 = pneg %p153
        %p353 = pneg %p182
        %p354 = pneg %p179
        %s355 = sand.u32 %s169, 1
        %s356 = scalar_lea.sflag [#allocation4], %s355
        %s357 = sand.u32 %s169, 1
        %s358 = smul.addr %s357, 768
        %s359 = scalar_lea.vmem [#allocation11], %s358
        %s360 = smul.u32 32, %s25
        %s361 = ssub.s32 125, %s360
        %p362 = scmp.lt.s32.totalorder %s361, 32
        %s363 = scalar_select %p362, %s361, 32
        %s364 = smul.u32 128, %s363
        %s365 = smul.u32 32, %s25
        %s366 = ssub.s32 125, %s365
        %p367 = scmp.lt.s32.totalorder %s366, 32
        %s368 = scalar_select %p367, %s366, 32
        %s369 = smul.u32 128, %s368
        %p370 = scmp.lt.s32.totalorder %s365, 124
        %s371 = scalar_select %p370, %s365, 124
        %s372 = smul.addr %s371, 8
        %s373 = scalar_lea.vmem %s1, %s372
        %s374 = smul.u32 32, %s25
        %s375 = ssub.s32 125, %s374
        %p376 = scmp.lt.s32.totalorder %s375, 32
        %s377 = scalar_select %p376, %s375, 32
        %s378 = smul.u32 128, %s377
        %s379 = smul.u32 32, %s25
        %s380 = ssub.s32 125, %s379
        %p381 = scmp.lt.s32.totalorder %s380, 32
        %s382 = scalar_select %p381, %s380, 32
        %s383 = smul.u32 128, %s382
        %s384 = smul.u32 %s383, 3
        %v386 = vld [vmem:[%s373] sm:$0xff]
        %v387 = vld [vmem:[%s373 + $0x8] sm:$0xff]
        %v388 = vld [vmem:[%s373 + $0x10] sm:$0xff]
        %v389 = vld [vmem:[%s373 + $0x18] sm:$0xff]
        %v390 = vld [vmem:[%s373 + $0x20] sm:$0xff]
        %v391 = vld [vmem:[%s373 + $0x28] sm:$0xff]
        %v392 = vld [vmem:[%s373 + $0x30] sm:$0xff]
        %v393 = vld [vmem:[%s373 + $0x38] sm:$0xff]
        %v394 = vld [vmem:[%s373 + $0x40] sm:$0xff]
        %v395 = vld [vmem:[%s373 + $0x48] sm:$0xff]
        %v396 = vld [vmem:[%s373 + $0x50] sm:$0xff]
        %v397 = vld [vmem:[%s373 + $0x58] sm:$0xff]
        %v398 = vld [vmem:[%s373 + $0x60] sm:$0xff]
        %v399 = vld [vmem:[%s373 + $0x68] sm:$0xff]
        %v400 = vld [vmem:[%s373 + $0x70] sm:$0xff]
        %v401 = vld [vmem:[%s373 + $0x78] sm:$0xff]
        %v402 = vld [vmem:[%s373 + $0x80] sm:$0xff]
        %v403 = vld [vmem:[%s373 + $0x88] sm:$0xff]
        %v404 = vld [vmem:[%s373 + $0x90] sm:$0xff]
        %v405 = vld [vmem:[%s373 + $0x98] sm:$0xff]
        %v406 = vld [vmem:[%s373 + $0xa0] sm:$0xff]
        %v407 = vld [vmem:[%s373 + $0xa8] sm:$0xff]
        %v408 = vld [vmem:[%s373 + $0xb0] sm:$0xff]
        %v409 = vld [vmem:[%s373 + $0xb8] sm:$0xff]
        %v410 = vld [vmem:[%s373 + $0xc0] sm:$0xff]
        %v411 = vld [vmem:[%s373 + $0xc8] sm:$0xff]
        %v412 = vld [vmem:[%s373 + $0xd0] sm:$0xff]
        %v413 = vld [vmem:[%s373 + $0xd8] sm:$0xff]
        %v414 = vld [vmem:[%s373 + $0xe0] sm:$0xff]
        %v415 = vld [vmem:[%s373 + $0xe8] sm:$0xff]
        %v416 = vld [vmem:[%s373 + $0xf0] sm:$0xff]
        %v417 = vld [vmem:[%s373 + $0xf8] sm:$0xff]
        %v418 = vld [vmem:[#allocation5] sm:$0xff]
        %v419 = vld [vmem:[#allocation5 + $0x8] sm:$0xff]
        %v420 = vld [vmem:[#allocation5 + $0x10] sm:$0xff]
        %v421 = vld [vmem:[#allocation5 + $0x18] sm:$0xff]
        %v422 = vld [vmem:[#allocation5 + $0x20] sm:$0xff]
        %v423 = vld [vmem:[#allocation5 + $0x28] sm:$0xff]
        %v424 = vld [vmem:[#allocation5 + $0x30] sm:$0xff]
        %v425 = vld [vmem:[#allocation5 + $0x38] sm:$0xff]
        %v426 = vld [vmem:[#allocation5 + $0x40] sm:$0xff]
        %v427 = vld [vmem:[#allocation5 + $0x48] sm:$0xff]
        %v428 = vld [vmem:[#allocation5 + $0x50] sm:$0xff]
        %v429 = vld [vmem:[#allocation5 + $0x58] sm:$0xff]
        %v430 = vld [vmem:[#allocation5 + $0x60] sm:$0x3]
        %vm431 = vcmask 801792
        %v433 = vsel %vm431, %v386, 0
        %v436 = vsel %vm431, %v387, 0
        %v439 = vsel %vm431, %v388, 0
        %v442 = vsel %vm431, %v389, 0
        %v445 = vsel %vm431, %v390, 0
        %v448 = vsel %vm431, %v391, 0
        %v451 = vsel %vm431, %v392, 0
        %v454 = vsel %vm431, %v393, 0
        %v457 = vsel %vm431, %v394, 0
        %v460 = vsel %vm431, %v395, 0
        %v463 = vsel %vm431, %v396, 0
        %v466 = vsel %vm431, %v397, 0
        %v469 = vsel %vm431, %v398, 0
        %v472 = vsel %vm431, %v399, 0
        %v475 = vsel %vm431, %v400, 0
        %v478 = vsel %vm431, %v401, 0
        %v481 = vsel %vm431, %v402, 0
        %v484 = vsel %vm431, %v403, 0
        %v487 = vsel %vm431, %v404, 0
        %v490 = vsel %vm431, %v405, 0
        %v493 = vsel %vm431, %v406, 0
        %v496 = vsel %vm431, %v407, 0
        %v499 = vsel %vm431, %v408, 0
        %v502 = vsel %vm431, %v409, 0
        %v505 = vsel %vm431, %v410, 0
        %v508 = vsel %vm431, %v411, 0
        %v511 = vsel %vm431, %v412, 0
        %v514 = vsel %vm431, %v413, 0
        %v517 = vsel %vm431, %v414, 0
        %v520 = vsel %vm431, %v415, 0
        %v523 = vsel %vm431, %v416, 0
        %v526 = vsel %vm431, %v417, 0
        %vm528 = vcmask 1041408
        %v530 = vsel %vm528, %v430, 0
        %532 = vmatprep.subr.mxu0 0.0
        %533 = vmatpush1.msra.mxu0 0.0
        %534 = vmatprep.subr.mxu0 0.0
        %535 = vmatpush1.msra.mxu0 0.0
        %536 = vmatprep.subr.mxu0 0.0
        %537 = vmatpush1.msra.mxu0 0.0
        %538 = vmatprep.subr.mxu0 0.0
        %539 = vmatpush1.msra.mxu0 %v530
        %540 = vmatprep.subr.mxu0 0.0
        %541 = vmatpush1.msra.mxu0 %v429
        %542 = vmatprep.subr.mxu0 0.0
        %543 = vmatpush1.msra.mxu0 %v428
        %544 = vmatprep.subr.mxu0 0.0
        %545 = vmatpush1.msra.mxu0 %v427
        %546 = vmatprep.subr.mxu0 0.0
        %547 = vmatpush1.msra.mxu0 %v426
        %548 = vmatprep.subr.mxu0 0.0
        %549 = vmatpush1.msra.mxu0 %v425
        %550 = vmatprep.subr.mxu0 0.0
        %551 = vmatpush1.msra.mxu0 %v424
        %552 = vmatprep.subr.mxu0 0.0
        %553 = vmatpush1.msra.mxu0 %v423
        %554 = vmatprep.subr.mxu0 0.0
        %555 = vmatpush1.msra.mxu0 %v422
        %556 = vmatprep.subr.mxu0 0.0
        %557 = vmatpush1.msra.mxu0 %v421
        %558 = vmatprep.subr.mxu0 0.0
        %559 = vmatpush1.msra.mxu0 %v420
        %560 = vmatprep.subr.mxu0 0.0
        %561 = vmatpush1.msra.mxu0 %v419
        %562 = vmatprep.subr.mxu0 0.0
        %563 = vmatpush1.msra.mxu0 %v418
        %564 = vmatprep.subr.mxu0 0.0
        %565 = vmatpush2.msra.mxu0 0.0
        %566 = vmatprep.subr.mxu0 0.0
        %567 = vmatpush2.msra.mxu0 0.0
        %568 = vmatprep.subr.mxu0 0.0
        %569 = vmatpush2.msra.mxu0 0.0
        %570 = vmatprep.subr.mxu0 0.0
        %571 = vmatpush2.msra.mxu0 0.0
        %572 = vmatprep.subr.mxu0 0.0
        %573 = vmatpush2.msra.mxu0 0.0
        %574 = vmatprep.subr.mxu0 0.0
        %575 = vmatpush2.msra.mxu0 0.0
        %576 = vmatprep.subr.mxu0 0.0
        %577 = vmatpush2.msra.mxu0 0.0
        %578 = vmatprep.subr.mxu0 0.0
        %579 = vmatpush2.msra.mxu0 0.0
        %580 = vmatprep.subr.mxu0 0.0
        %581 = vmatpush2.msra.mxu0 0.0
        %582 = vmatprep.subr.mxu0 0.0
        %583 = vmatpush2.msra.mxu0 0.0
        %584 = vmatprep.subr.mxu0 0.0
        %585 = vmatpush2.msra.mxu0 0.0
        %586 = vmatprep.subr.mxu0 0.0
        %587 = vmatpush2.msra.mxu0 0.0
        %588 = vmatprep.subr.mxu0 0.0
        %589 = vmatpush2.msra.mxu0 0.0
        %590 = vmatprep.subr.mxu0 0.0
        %591 = vmatpush2.msra.mxu0 0.0
        %592 = vmatprep.subr.mxu0 0.0
        %593 = vmatpush2.msra.mxu0 0.0
        %594 = vmatprep.subr.mxu0 0.0
        %595 = vmatpush2.msra.mxu0 0.0
        %596 = vmatprep.mubr.f32.mxu0 0.0
        %597 = vmatmul.mubr.f32.gmra.mxu0 %v433
        %v598 = vpop.f32.mrf.mxu0
        %v599 = vadd.f32 0.0, %v598
        %v600 = vpop.f32.mrf.mxu0
        %601 = vmatprep.mubr.f32.mxu0 0.0
        %602 = vmatmul.mubr.f32.gmra.mxu0 %v436
        %v603 = vpop.f32.mrf.mxu0
        %v604 = vadd.f32 0.0, %v603
        %v605 = vpop.f32.mrf.mxu0
        %606 = vmatprep.mubr.f32.mxu0 0.0
        %607 = vmatmul.mubr.f32.gmra.mxu0 %v439
        %v608 = vpop.f32.mrf.mxu0
        %v609 = vadd.f32 0.0, %v608
        %v610 = vpop.f32.mrf.mxu0
        %611 = vmatprep.mubr.f32.mxu0 0.0
        %612 = vmatmul.mubr.f32.gmra.mxu0 %v442
        %v613 = vpop.f32.mrf.mxu0
        %v614 = vadd.f32 0.0, %v613
        %v615 = vpop.f32.mrf.mxu0
        %616 = vmatprep.mubr.f32.mxu0 0.0
        %617 = vmatmul.mubr.f32.gmra.mxu0 %v445
        %v618 = vpop.f32.mrf.mxu0
        %v619 = vadd.f32 0.0, %v618
        %v620 = vpop.f32.mrf.mxu0
        %621 = vmatprep.mubr.f32.mxu0 0.0
        %622 = vmatmul.mubr.f32.gmra.mxu0 %v448
        %v623 = vpop.f32.mrf.mxu0
        %v624 = vadd.f32 0.0, %v623
        %v625 = vpop.f32.mrf.mxu0
        %626 = vmatprep.mubr.f32.mxu0 0.0
        %627 = vmatmul.mubr.f32.gmra.mxu0 %v451
        %v628 = vpop.f32.mrf.mxu0
        %v629 = vadd.f32 0.0, %v628
        %v630 = vpop.f32.mrf.mxu0
        %631 = vmatprep.mubr.f32.mxu0 0.0
        %632 = vmatmul.mubr.f32.gmra.mxu0 %v454
        %v633 = vpop.f32.mrf.mxu0
        %v634 = vadd.f32 0.0, %v633
        %v635 = vpop.f32.mrf.mxu0
        %636 = vmatprep.mubr.f32.mxu0 0.0
        %637 = vmatmul.mubr.f32.gmra.mxu0 %v457
        %v638 = vpop.f32.mrf.mxu0
        %v639 = vadd.f32 0.0, %v638
        %v640 = vpop.f32.mrf.mxu0
        %641 = vmatprep.mubr.f32.mxu0 0.0
        %642 = vmatmul.mubr.f32.gmra.mxu0 %v460
        %v643 = vpop.f32.mrf.mxu0
        %v644 = vadd.f32 0.0, %v643
        %v645 = vpop.f32.mrf.mxu0
        %646 = vmatprep.mubr.f32.mxu0 0.0
        %647 = vmatmul.mubr.f32.gmra.mxu0 %v463
        %v648 = vpop.f32.mrf.mxu0
        %v649 = vadd.f32 0.0, %v648
        %v650 = vpop.f32.mrf.mxu0
        %651 = vmatprep.mubr.f32.mxu0 0.0
        %652 = vmatmul.mubr.f32.gmra.mxu0 %v466
        %v653 = vpop.f32.mrf.mxu0
        %v654 = vadd.f32 0.0, %v653
        %v655 = vpop.f32.mrf.mxu0
        %656 = vmatprep.mubr.f32.mxu0 0.0
        %657 = vmatmul.mubr.f32.gmra.mxu0 %v469
        %v658 = vpop.f32.mrf.mxu0
        %v659 = vadd.f32 0.0, %v658
        %v660 = vpop.f32.mrf.mxu0
        %661 = vmatprep.mubr.f32.mxu0 0.0
        %662 = vmatmul.mubr.f32.gmra.mxu0 %v472
        %v663 = vpop.f32.mrf.mxu0
        %v664 = vadd.f32 0.0, %v663
        %v665 = vpop.f32.mrf.mxu0
        %666 = vmatprep.mubr.f32.mxu0 0.0
        %667 = vmatmul.mubr.f32.gmra.mxu0 %v475
        %v668 = vpop.f32.mrf.mxu0
        %v669 = vadd.f32 0.0, %v668
        %v670 = vpop.f32.mrf.mxu0
        %671 = vmatprep.mubr.f32.mxu0 0.0
        %672 = vmatmul.mubr.f32.gmra.mxu0 %v478
        %v673 = vpop.f32.mrf.mxu0
        %v674 = vadd.f32 0.0, %v673
        %v675 = vpop.f32.mrf.mxu0
        %676 = vmatprep.mubr.f32.mxu0 0.0
        %677 = vmatmul.mubr.f32.gmra.mxu0 %v481
        %v678 = vpop.f32.mrf.mxu0
        %v679 = vadd.f32 0.0, %v678
        %v680 = vpop.f32.mrf.mxu0
        %681 = vmatprep.mubr.f32.mxu0 0.0
        %682 = vmatmul.mubr.f32.gmra.mxu0 %v484
        %v683 = vpop.f32.mrf.mxu0
        %v684 = vadd.f32 0.0, %v683
        %v685 = vpop.f32.mrf.mxu0
        %686 = vmatprep.mubr.f32.mxu0 0.0
        %687 = vmatmul.mubr.f32.gmra.mxu0 %v487
        %v688 = vpop.f32.mrf.mxu0
        %v689 = vadd.f32 0.0, %v688
        %v690 = vpop.f32.mrf.mxu0
        %691 = vmatprep.mubr.f32.mxu0 0.0
        %692 = vmatmul.mubr.f32.gmra.mxu0 %v490
        %v693 = vpop.f32.mrf.mxu0
        %v694 = vadd.f32 0.0, %v693
        %v695 = vpop.f32.mrf.mxu0
        %696 = vmatprep.mubr.f32.mxu0 0.0
        %697 = vmatmul.mubr.f32.gmra.mxu0 %v493
        %v698 = vpop.f32.mrf.mxu0
        %v699 = vadd.f32 0.0, %v698
        %v700 = vpop.f32.mrf.mxu0
        %701 = vmatprep.mubr.f32.mxu0 0.0
        %702 = vmatmul.mubr.f32.gmra.mxu0 %v496
        %v703 = vpop.f32.mrf.mxu0
        %v704 = vadd.f32 0.0, %v703
        %v705 = vpop.f32.mrf.mxu0
        %706 = vmatprep.mubr.f32.mxu0 0.0
        %707 = vmatmul.mubr.f32.gmra.mxu0 %v499
        %v708 = vpop.f32.mrf.mxu0
        %v709 = vadd.f32 0.0, %v708
        %v710 = vpop.f32.mrf.mxu0
        %711 = vmatprep.mubr.f32.mxu0 0.0
        %712 = vmatmul.mubr.f32.gmra.mxu0 %v502
        %v713 = vpop.f32.mrf.mxu0
        %v714 = vadd.f32 0.0, %v713
        %v715 = vpop.f32.mrf.mxu0
        %716 = vmatprep.mubr.f32.mxu0 0.0
        %717 = vmatmul.mubr.f32.gmra.mxu0 %v505
        %v718 = vpop.f32.mrf.mxu0
        %v719 = vadd.f32 0.0, %v718
        %v720 = vpop.f32.mrf.mxu0
        %721 = vmatprep.mubr.f32.mxu0 0.0
        %722 = vmatmul.mubr.f32.gmra.mxu0 %v508
        %v723 = vpop.f32.mrf.mxu0
        %v724 = vadd.f32 0.0, %v723
        %v725 = vpop.f32.mrf.mxu0
        %726 = vmatprep.mubr.f32.mxu0 0.0
        %727 = vmatmul.mubr.f32.gmra.mxu0 %v511
        %v728 = vpop.f32.mrf.mxu0
        %v729 = vadd.f32 0.0, %v728
        %v730 = vpop.f32.mrf.mxu0
        %731 = vmatprep.mubr.f32.mxu0 0.0
        %732 = vmatmul.mubr.f32.gmra.mxu0 %v514
        %v733 = vpop.f32.mrf.mxu0
        %v734 = vadd.f32 0.0, %v733
        %v735 = vpop.f32.mrf.mxu0
        %736 = vmatprep.mubr.f32.mxu0 0.0
        %737 = vmatmul.mubr.f32.gmra.mxu0 %v517
        %v738 = vpop.f32.mrf.mxu0
        %v739 = vadd.f32 0.0, %v738
        %v740 = vpop.f32.mrf.mxu0
        %741 = vmatprep.mubr.f32.mxu0 0.0
        %742 = vmatmul.mubr.f32.gmra.mxu0 %v520
        %v743 = vpop.f32.mrf.mxu0
        %v744 = vadd.f32 0.0, %v743
        %v745 = vpop.f32.mrf.mxu0
        %746 = vmatprep.mubr.f32.mxu0 0.0
        %747 = vmatmul.mubr.f32.gmra.mxu0 %v523
        %v748 = vpop.f32.mrf.mxu0
        %v749 = vadd.f32 0.0, %v748
        %v750 = vpop.f32.mrf.mxu0
        %751 = vmatprep.mubr.f32.mxu0 0.0
        %752 = vmatmul.mubr.f32.gmra.mxu0 %v526
        %v753 = vpop.f32.mrf.mxu0
        %v754 = vadd.f32 0.0, %v753
        %v755 = vpop.f32.mrf.mxu0
        %756 = vdwg.mxu0
        %v757 = vsub.f32 %v386, %v599
        %v758 = vsub.f32 %v387, %v604
        %v759 = vsub.f32 %v388, %v609
        %v760 = vsub.f32 %v389, %v614
        %v761 = vsub.f32 %v390, %v619
        %v762 = vsub.f32 %v391, %v624
        %v763 = vsub.f32 %v392, %v629
        %v764 = vsub.f32 %v393, %v634
        %v765 = vsub.f32 %v394, %v639
        %v766 = vsub.f32 %v395, %v644
        %v767 = vsub.f32 %v396, %v649
        %v768 = vsub.f32 %v397, %v654
        %v769 = vsub.f32 %v398, %v659
        %v770 = vsub.f32 %v399, %v664
        %v771 = vsub.f32 %v400, %v669
        %v772 = vsub.f32 %v401, %v674
        %v773 = vsub.f32 %v402, %v679
        %v774 = vsub.f32 %v403, %v684
        %v775 = vsub.f32 %v404, %v689
        %v776 = vsub.f32 %v405, %v694
        %v777 = vsub.f32 %v406, %v699
        %v778 = vsub.f32 %v407, %v704
        %v779 = vsub.f32 %v408, %v709
        %v780 = vsub.f32 %v409, %v714
        %v781 = vsub.f32 %v410, %v719
        %v782 = vsub.f32 %v411, %v724
        %v783 = vsub.f32 %v412, %v729
        %v784 = vsub.f32 %v413, %v734
        %v785 = vsub.f32 %v414, %v739
        %v786 = vsub.f32 %v415, %v744
        %v787 = vsub.f32 %v416, %v749
        %v788 = vsub.f32 %v417, %v754
        %v789 = vmul.f32 %v757, %v757
        %v790 = vmul.f32 %v758, %v758
        %v791 = vmul.f32 %v759, %v759
        %v792 = vmul.f32 %v760, %v760
        %v793 = vmul.f32 %v761, %v761
        %v794 = vmul.f32 %v762, %v762
        %v795 = vmul.f32 %v763, %v763
        %v796 = vmul.f32 %v764, %v764
        %v797 = vmul.f32 %v765, %v765
        %v798 = vmul.f32 %v766, %v766
        %v799 = vmul.f32 %v767, %v767
        %v800 = vmul.f32 %v768, %v768
        %v801 = vmul.f32 %v769, %v769
        %v802 = vmul.f32 %v770, %v770
        %v803 = vmul.f32 %v771, %v771
        %v804 = vmul.f32 %v772, %v772
        %v805 = vmul.f32 %v773, %v773
        %v806 = vmul.f32 %v774, %v774
        %v807 = vmul.f32 %v775, %v775
        %v808 = vmul.f32 %v776, %v776
        %v809 = vmul.f32 %v777, %v777
        %v810 = vmul.f32 %v778, %v778
        %v811 = vmul.f32 %v779, %v779
        %v812 = vmul.f32 %v780, %v780
        %v813 = vmul.f32 %v781, %v781
        %v814 = vmul.f32 %v782, %v782
        %v815 = vmul.f32 %v783, %v783
        %v816 = vmul.f32 %v784, %v784
        %v817 = vmul.f32 %v785, %v785
        %v818 = vmul.f32 %v786, %v786
        %v819 = vmul.f32 %v787, %v787
        %v820 = vmul.f32 %v788, %v788
        %v822 = vsel %vm431, %v789, 0
        %v825 = vsel %vm431, %v790, 0
        %v828 = vsel %vm431, %v791, 0
        %v831 = vsel %vm431, %v792, 0
        %v834 = vsel %vm431, %v793, 0
        %v837 = vsel %vm431, %v794, 0
        %v840 = vsel %vm431, %v795, 0
        %v843 = vsel %vm431, %v796, 0
        %v846 = vsel %vm431, %v797, 0
        %v849 = vsel %vm431, %v798, 0
        %v852 = vsel %vm431, %v799, 0
        %v855 = vsel %vm431, %v800, 0
        %v858 = vsel %vm431, %v801, 0
        %v861 = vsel %vm431, %v802, 0
        %v864 = vsel %vm431, %v803, 0
        %v867 = vsel %vm431, %v804, 0
        %v870 = vsel %vm431, %v805, 0
        %v873 = vsel %vm431, %v806, 0
        %v876 = vsel %vm431, %v807, 0
        %v879 = vsel %vm431, %v808, 0
        %v882 = vsel %vm431, %v809, 0
        %v885 = vsel %vm431, %v810, 0
        %v888 = vsel %vm431, %v811, 0
        %v891 = vsel %vm431, %v812, 0
        %v894 = vsel %vm431, %v813, 0
        %v897 = vsel %vm431, %v814, 0
        %v900 = vsel %vm431, %v815, 0
        %v903 = vsel %vm431, %v816, 0
        %v906 = vsel %vm431, %v817, 0
        %v909 = vsel %vm431, %v818, 0
        %v912 = vsel %vm431, %v819, 0
        %v915 = vsel %vm431, %v820, 0
        %917 = vmatprep.subr.mxu0 0.0
        %918 = vmatpush1.msra.mxu0 0.0
        %919 = vmatprep.subr.mxu0 0.0
        %920 = vmatpush1.msra.mxu0 0.0
        %921 = vmatprep.subr.mxu0 0.0
        %922 = vmatpush1.msra.mxu0 0.0
        %923 = vmatprep.subr.mxu0 0.0
        %924 = vmatpush1.msra.mxu0 %v530
        %925 = vmatprep.subr.mxu0 0.0
        %926 = vmatpush1.msra.mxu0 %v429
        %927 = vmatprep.subr.mxu0 0.0
        %928 = vmatpush1.msra.mxu0 %v428
        %929 = vmatprep.subr.mxu0 0.0
        %930 = vmatpush1.msra.mxu0 %v427
        %931 = vmatprep.subr.mxu0 0.0
        %932 = vmatpush1.msra.mxu0 %v426
        %933 = vmatprep.subr.mxu0 0.0
        %934 = vmatpush1.msra.mxu0 %v425
        %935 = vmatprep.subr.mxu0 0.0
        %936 = vmatpush1.msra.mxu0 %v424
        %937 = vmatprep.subr.mxu0 0.0
        %938 = vmatpush1.msra.mxu0 %v423
        %939 = vmatprep.subr.mxu0 0.0
        %940 = vmatpush1.msra.mxu0 %v422
        %941 = vmatprep.subr.mxu0 0.0
        %942 = vmatpush1.msra.mxu0 %v421
        %943 = vmatprep.subr.mxu0 0.0
        %944 = vmatpush1.msra.mxu0 %v420
        %945 = vmatprep.subr.mxu0 0.0
        %946 = vmatpush1.msra.mxu0 %v419
        %947 = vmatprep.subr.mxu0 0.0
        %948 = vmatpush1.msra.mxu0 %v418
        %949 = vmatprep.subr.mxu0 0.0
        %950 = vmatpush2.msra.mxu0 0.0
        %951 = vmatprep.subr.mxu0 0.0
        %952 = vmatpush2.msra.mxu0 0.0
        %953 = vmatprep.subr.mxu0 0.0
        %954 = vmatpush2.msra.mxu0 0.0
        %955 = vmatprep.subr.mxu0 0.0
        %956 = vmatpush2.msra.mxu0 0.0
        %957 = vmatprep.subr.mxu0 0.0
        %958 = vmatpush2.msra.mxu0 0.0
        %959 = vmatprep.subr.mxu0 0.0
        %960 = vmatpush2.msra.mxu0 0.0
        %961 = vmatprep.subr.mxu0 0.0
        %962 = vmatpush2.msra.mxu0 0.0
        %963 = vmatprep.subr.mxu0 0.0
        %964 = vmatpush2.msra.mxu0 0.0
        %965 = vmatprep.subr.mxu0 0.0
        %966 = vmatpush2.msra.mxu0 0.0
        %967 = vmatprep.subr.mxu0 0.0
        %968 = vmatpush2.msra.mxu0 0.0
        %969 = vmatprep.subr.mxu0 0.0
        %970 = vmatpush2.msra.mxu0 0.0
        %971 = vmatprep.subr.mxu0 0.0
        %972 = vmatpush2.msra.mxu0 0.0
        %973 = vmatprep.subr.mxu0 0.0
        %974 = vmatpush2.msra.mxu0 0.0
        %975 = vmatprep.subr.mxu0 0.0
        %976 = vmatpush2.msra.mxu0 0.0
        %977 = vmatprep.subr.mxu0 0.0
        %978 = vmatpush2.msra.mxu0 0.0
        %979 = vmatprep.subr.mxu0 0.0
        %980 = vmatpush2.msra.mxu0 0.0
        %981 = vmatprep.mubr.f32.mxu0 0.0
        %982 = vmatmul.mubr.f32.gmra.mxu0 %v822
        %v983 = vpop.f32.mrf.mxu0
        %v984 = vadd.f32 1e-05, %v983
        %v985 = vpop.f32.mrf.mxu0
        %986 = vmatprep.mubr.f32.mxu0 0.0
        %987 = vmatmul.mubr.f32.gmra.mxu0 %v825
        %v988 = vpop.f32.mrf.mxu0
        %v989 = vadd.f32 1e-05, %v988
        %v990 = vpop.f32.mrf.mxu0
        %991 = vmatprep.mubr.f32.mxu0 0.0
        %992 = vmatmul.mubr.f32.gmra.mxu0 %v828
        %v993 = vpop.f32.mrf.mxu0
        %v994 = vadd.f32 1e-05, %v993
        %v995 = vpop.f32.mrf.mxu0
        %996 = vmatprep.mubr.f32.mxu0 0.0
        %997 = vmatmul.mubr.f32.gmra.mxu0 %v831
        %v998 = vpop.f32.mrf.mxu0
        %v999 = vadd.f32 1e-05, %v998
        %v1000 = vpop.f32.mrf.mxu0
        %1001 = vmatprep.mubr.f32.mxu0 0.0
        %1002 = vmatmul.mubr.f32.gmra.mxu0 %v834
        %v1003 = vpop.f32.mrf.mxu0
        %v1004 = vadd.f32 1e-05, %v1003
        %v1005 = vpop.f32.mrf.mxu0
        %1006 = vmatprep.mubr.f32.mxu0 0.0
        %1007 = vmatmul.mubr.f32.gmra.mxu0 %v837
        %v1008 = vpop.f32.mrf.mxu0
        %v1009 = vadd.f32 1e-05, %v1008
        %v1010 = vpop.f32.mrf.mxu0
        %1011 = vmatprep.mubr.f32.mxu0 0.0
        %1012 = vmatmul.mubr.f32.gmra.mxu0 %v840
        %v1013 = vpop.f32.mrf.mxu0
        %v1014 = vadd.f32 1e-05, %v1013
        %v1015 = vpop.f32.mrf.mxu0
        %1016 = vmatprep.mubr.f32.mxu0 0.0
        %1017 = vmatmul.mubr.f32.gmra.mxu0 %v843
        %v1018 = vpop.f32.mrf.mxu0
        %v1019 = vadd.f32 1e-05, %v1018
        %v1020 = vpop.f32.mrf.mxu0
        %1021 = vmatprep.mubr.f32.mxu0 0.0
        %1022 = vmatmul.mubr.f32.gmra.mxu0 %v846
        %v1023 = vpop.f32.mrf.mxu0
        %v1024 = vadd.f32 1e-05, %v1023
        %v1025 = vpop.f32.mrf.mxu0
        %1026 = vmatprep.mubr.f32.mxu0 0.0
        %1027 = vmatmul.mubr.f32.gmra.mxu0 %v849
        %v1028 = vpop.f32.mrf.mxu0
        %v1029 = vadd.f32 1e-05, %v1028
        %v1030 = vpop.f32.mrf.mxu0
        %1031 = vmatprep.mubr.f32.mxu0 0.0
        %1032 = vmatmul.mubr.f32.gmra.mxu0 %v852
        %v1033 = vpop.f32.mrf.mxu0
        %v1034 = vadd.f32 1e-05, %v1033
        %v1035 = vpop.f32.mrf.mxu0
        %1036 = vmatprep.mubr.f32.mxu0 0.0
        %1037 = vmatmul.mubr.f32.gmra.mxu0 %v855
        %v1038 = vpop.f32.mrf.mxu0
        %v1039 = vadd.f32 1e-05, %v1038
        %v1040 = vpop.f32.mrf.mxu0
        %1041 = vmatprep.mubr.f32.mxu0 0.0
        %1042 = vmatmul.mubr.f32.gmra.mxu0 %v858
        %v1043 = vpop.f32.mrf.mxu0
        %v1044 = vadd.f32 1e-05, %v1043
        %v1045 = vpop.f32.mrf.mxu0
        %1046 = vmatprep.mubr.f32.mxu0 0.0
        %1047 = vmatmul.mubr.f32.gmra.mxu0 %v861
        %v1048 = vpop.f32.mrf.mxu0
        %v1049 = vadd.f32 1e-05, %v1048
        %v1050 = vpop.f32.mrf.mxu0
        %1051 = vmatprep.mubr.f32.mxu0 0.0
        %1052 = vmatmul.mubr.f32.gmra.mxu0 %v864
        %v1053 = vpop.f32.mrf.mxu0
        %v1054 = vadd.f32 1e-05, %v1053
        %v1055 = vpop.f32.mrf.mxu0
        %1056 = vmatprep.mubr.f32.mxu0 0.0
        %1057 = vmatmul.mubr.f32.gmra.mxu0 %v867
        %v1058 = vpop.f32.mrf.mxu0
        %v1059 = vadd.f32 1e-05, %v1058
        %v1060 = vpop.f32.mrf.mxu0
        %1061 = vmatprep.mubr.f32.mxu0 0.0
        %1062 = vmatmul.mubr.f32.gmra.mxu0 %v870
        %v1063 = vpop.f32.mrf.mxu0
        %v1064 = vadd.f32 1e-05, %v1063
        %v1065 = vpop.f32.mrf.mxu0
        %1066 = vmatprep.mubr.f32.mxu0 0.0
        %1067 = vmatmul.mubr.f32.gmra.mxu0 %v873
        %v1068 = vpop.f32.mrf.mxu0
        %v1069 = vadd.f32 1e-05, %v1068
        %v1070 = vpop.f32.mrf.mxu0
        %1071 = vmatprep.mubr.f32.mxu0 0.0
        %1072 = vmatmul.mubr.f32.gmra.mxu0 %v876
        %v1073 = vpop.f32.mrf.mxu0
        %v1074 = vadd.f32 1e-05, %v1073
        %v1075 = vpop.f32.mrf.mxu0
        %1076 = vmatprep.mubr.f32.mxu0 0.0
        %1077 = vmatmul.mubr.f32.gmra.mxu0 %v879
        %v1078 = vpop.f32.mrf.mxu0
        %v1079 = vadd.f32 1e-05, %v1078
        %v1080 = vpop.f32.mrf.mxu0
        %1081 = vmatprep.mubr.f32.mxu0 0.0
        %1082 = vmatmul.mubr.f32.gmra.mxu0 %v882
        %v1083 = vpop.f32.mrf.mxu0
        %v1084 = vadd.f32 1e-05, %v1083
        %v1085 = vpop.f32.mrf.mxu0
        %1086 = vmatprep.mubr.f32.mxu0 0.0
        %1087 = vmatmul.mubr.f32.gmra.mxu0 %v885
        %v1088 = vpop.f32.mrf.mxu0
        %v1089 = vadd.f32 1e-05, %v1088
        %v1090 = vpop.f32.mrf.mxu0
        %1091 = vmatprep.mubr.f32.mxu0 0.0
        %1092 = vmatmul.mubr.f32.gmra.mxu0 %v888
        %v1093 = vpop.f32.mrf.mxu0
        %v1094 = vadd.f32 1e-05, %v1093
        %v1095 = vpop.f32.mrf.mxu0
        %1096 = vmatprep.mubr.f32.mxu0 0.0
        %1097 = vmatmul.mubr.f32.gmra.mxu0 %v891
        %v1098 = vpop.f32.mrf.mxu0
        %v1099 = vadd.f32 1e-05, %v1098
        %v1100 = vpop.f32.mrf.mxu0
        %1101 = vmatprep.mubr.f32.mxu0 0.0
        %1102 = vmatmul.mubr.f32.gmra.mxu0 %v894
        %v1103 = vpop.f32.mrf.mxu0
        %v1104 = vadd.f32 1e-05, %v1103
        %v1105 = vpop.f32.mrf.mxu0
        %1106 = vmatprep.mubr.f32.mxu0 0.0
        %1107 = vmatmul.mubr.f32.gmra.mxu0 %v897
        %v1108 = vpop.f32.mrf.mxu0
        %v1109 = vadd.f32 1e-05, %v1108
        %v1110 = vpop.f32.mrf.mxu0
        %1111 = vmatprep.mubr.f32.mxu0 0.0
        %1112 = vmatmul.mubr.f32.gmra.mxu0 %v900
        %v1113 = vpop.f32.mrf.mxu0
        %v1114 = vadd.f32 1e-05, %v1113
        %v1115 = vpop.f32.mrf.mxu0
        %1116 = vmatprep.mubr.f32.mxu0 0.0
        %1117 = vmatmul.mubr.f32.gmra.mxu0 %v903
        %v1118 = vpop.f32.mrf.mxu0
        %v1119 = vadd.f32 1e-05, %v1118
        %v1120 = vpop.f32.mrf.mxu0
        %1121 = vmatprep.mubr.f32.mxu0 0.0
        %1122 = vmatmul.mubr.f32.gmra.mxu0 %v906
        %v1123 = vpop.f32.mrf.mxu0
        %v1124 = vadd.f32 1e-05, %v1123
        %v1125 = vpop.f32.mrf.mxu0
        %1126 = vmatprep.mubr.f32.mxu0 0.0
        %1127 = vmatmul.mubr.f32.gmra.mxu0 %v909
        %v1128 = vpop.f32.mrf.mxu0
        %v1129 = vadd.f32 1e-05, %v1128
        %v1130 = vpop.f32.mrf.mxu0
        %1131 = vmatprep.mubr.f32.mxu0 0.0
        %1132 = vmatmul.mubr.f32.gmra.mxu0 %v912
        %v1133 = vpop.f32.mrf.mxu0
        %v1134 = vadd.f32 1e-05, %v1133
        %v1135 = vpop.f32.mrf.mxu0
        %1136 = vmatprep.mubr.f32.mxu0 0.0
        %1137 = vmatmul.mubr.f32.gmra.mxu0 %v915
        %v1138 = vpop.f32.mrf.mxu0
        %v1139 = vadd.f32 1e-05, %v1138
        %v1140 = vpop.f32.mrf.mxu0
        %1141 = vdwg.mxu0
        %v1142 = vrsqrt.pop %v984
        %v1143 = vrsqrt.pop %v989
        %v1144 = vrsqrt.pop %v994
        %v1145 = vrsqrt.pop %v999
        %v1146 = vrsqrt.pop %v1004
        %v1147 = vrsqrt.pop %v1009
        %v1148 = vrsqrt.pop %v1014
        %v1149 = vrsqrt.pop %v1019
        %v1150 = vrsqrt.pop %v1024
        %v1151 = vrsqrt.pop %v1029
        %v1152 = vrsqrt.pop %v1034
        %v1153 = vrsqrt.pop %v1039
        %v1154 = vrsqrt.pop %v1044
        %v1155 = vrsqrt.pop %v1049
        %v1156 = vrsqrt.pop %v1054
        %v1157 = vrsqrt.pop %v1059
        %v1158 = vrsqrt.pop %v1064
        %v1159 = vrsqrt.pop %v1069
        %v1160 = vrsqrt.pop %v1074
        %v1161 = vrsqrt.pop %v1079
        %v1162 = vrsqrt.pop %v1084
        %v1163 = vrsqrt.pop %v1089
        %v1164 = vrsqrt.pop %v1094
        %v1165 = vrsqrt.pop %v1099
        %v1166 = vrsqrt.pop %v1104
        %v1167 = vrsqrt.pop %v1109
        %v1168 = vrsqrt.pop %v1114
        %v1169 = vrsqrt.pop %v1119
        %v1170 = vrsqrt.pop %v1124
        %v1171 = vrsqrt.pop %v1129
        %v1172 = vrsqrt.pop %v1134
        %v1173 = vrsqrt.pop %v1139
        %v1174 = vmul.f32 %v757, %v1142
        %v1175 = vmul.f32 %v758, %v1143
        %v1176 = vmul.f32 %v759, %v1144
        %v1177 = vmul.f32 %v760, %v1145
        %v1178 = vmul.f32 %v761, %v1146
        %v1179 = vmul.f32 %v762, %v1147
        %v1180 = vmul.f32 %v763, %v1148
        %v1181 = vmul.f32 %v764, %v1149
        %v1182 = vmul.f32 %v765, %v1150
        %v1183 = vmul.f32 %v766, %v1151
        %v1184 = vmul.f32 %v767, %v1152
        %v1185 = vmul.f32 %v768, %v1153
        %v1186 = vmul.f32 %v769, %v1154
        %v1187 = vmul.f32 %v770, %v1155
        %v1188 = vmul.f32 %v771, %v1156
        %v1189 = vmul.f32 %v772, %v1157
        %v1190 = vmul.f32 %v773, %v1158
        %v1191 = vmul.f32 %v774, %v1159
        %v1192 = vmul.f32 %v775, %v1160
        %v1193 = vmul.f32 %v776, %v1161
        %v1194 = vmul.f32 %v777, %v1162
        %v1195 = vmul.f32 %v778, %v1163
        %v1196 = vmul.f32 %v779, %v1164
        %v1197 = vmul.f32 %v780, %v1165
        %v1198 = vmul.f32 %v781, %v1166
        %v1199 = vmul.f32 %v782, %v1167
        %v1200 = vmul.f32 %v783, %v1168
        %v1201 = vmul.f32 %v784, %v1169
        %v1202 = vmul.f32 %v785, %v1170
        %v1203 = vmul.f32 %v786, %v1171
        %v1204 = vmul.f32 %v787, %v1172
        %v1205 = vmul.f32 %v788, %v1173
        %v1206 = vpack.c.bf16 %v1175, %v1174
        %v1207 = vpack.c.bf16 %v1177, %v1176
        %v1208 = vpack.c.bf16 %v1179, %v1178
        %v1209 = vpack.c.bf16 %v1181, %v1180
        %v1210 = vpack.c.bf16 %v1183, %v1182
        %v1211 = vpack.c.bf16 %v1185, %v1184
        %v1212 = vpack.c.bf16 %v1187, %v1186
        %v1213 = vpack.c.bf16 %v1189, %v1188
        %v1214 = vpack.c.bf16 %v1191, %v1190
        %v1215 = vpack.c.bf16 %v1193, %v1192
        %v1216 = vpack.c.bf16 %v1195, %v1194
        %v1217 = vpack.c.bf16 %v1197, %v1196
        %v1218 = vpack.c.bf16 %v1199, %v1198
        %v1219 = vpack.c.bf16 %v1201, %v1200
        %v1220 = vpack.c.bf16 %v1203, %v1202
        %v1221 = vpack.c.bf16 %v1205, %v1204
        %v1222 = vld [vmem:[#allocation7] sm:$0xff]
        %v1223 = vld [vmem:[#allocation7 + $0x8] sm:$0xff]
        %v1224 = vld [vmem:[#allocation7 + $0x10] sm:$0xff]
        %v1225 = vld [vmem:[#allocation7 + $0x18] sm:$0xff]
        %v1226 = vld [vmem:[#allocation7 + $0x20] sm:$0xff]
        %v1227 = vld [vmem:[#allocation7 + $0x28] sm:$0xff]
        %v1228 = vld [vmem:[#allocation7 + $0x30] sm:$0xff]
        %v1229 = vld [vmem:[#allocation7 + $0x38] sm:$0xff]
        %v1230 = vld [vmem:[#allocation7 + $0x40] sm:$0xff]
        %v1231 = vld [vmem:[#allocation7 + $0x48] sm:$0xff]
        %v1232 = vld [vmem:[#allocation7 + $0x50] sm:$0xff]
        %v1233 = vld [vmem:[#allocation7 + $0x58] sm:$0xff]
        %v1234 = vld [vmem:[#allocation7 + $0x60] sm:$0x11]
        %v1248 = vunpack.c.l.b16 %v1222
        %v1249 = vunpack.c.h.b16 %v1222
        %v1250 = vunpack.c.l.b16 %v1223
        %v1251 = vunpack.c.h.b16 %v1223
        %v1252 = vunpack.c.l.b16 %v1224
        %v1253 = vunpack.c.h.b16 %v1224
        %v1254 = vunpack.c.l.b16 %v1225
        %v1255 = vunpack.c.h.b16 %v1225
        %v1256 = vunpack.c.l.b16 %v1226
        %v1257 = vunpack.c.h.b16 %v1226
        %v1258 = vunpack.c.l.b16 %v1227
        %v1259 = vunpack.c.h.b16 %v1227
        %v1260 = vunpack.c.l.b16 %v1228
        %v1261 = vunpack.c.h.b16 %v1228
        %v1262 = vunpack.c.l.b16 %v1229
        %v1263 = vunpack.c.h.b16 %v1229
        %v1264 = vunpack.c.l.b16 %v1230
        %v1265 = vunpack.c.h.b16 %v1230
        %v1266 = vunpack.c.l.b16 %v1231
        %v1267 = vunpack.c.h.b16 %v1231
        %v1268 = vunpack.c.l.b16 %v1232
        %v1269 = vunpack.c.h.b16 %v1232
        %v1270 = vunpack.c.l.b16 %v1233
        %v1271 = vunpack.c.h.b16 %v1233
        %v1272 = vunpack.c.l.b16 %v1234
        %v1273 = vunpack.c.h.b16 %v1234
        %v1274 = vpack.c.b16 %v1250, %v1248
        %v1275 = vpack.c.b16 %v1251, %v1249
        %v1276 = vpack.c.b16 %v1254, %v1252
        %v1277 = vpack.c.b16 %v1255, %v1253
        %v1278 = vpack.c.b16 %v1258, %v1256
        %v1279 = vpack.c.b16 %v1259, %v1257
        %v1280 = vpack.c.b16 %v1262, %v1260
        %v1281 = vpack.c.b16 %v1263, %v1261
        %v1282 = vpack.c.b16 %v1266, %v1264
        %v1283 = vpack.c.b16 %v1267, %v1265
        %v1284 = vpack.c.b16 %v1270, %v1268
        %v1285 = vpack.c.b16 %v1271, %v1269
        %v1286 = vpack.c.b16 %v1272, %v1272
        %v1287 = vpack.c.b16 %v1273, %v1273
        %v1301 = vsel %vm431, %v1206, 0
        %v1304 = vsel %vm431, %v1207, 0
        %v1307 = vsel %vm431, %v1208, 0
        %v1310 = vsel %vm431, %v1209, 0
        %v1313 = vsel %vm431, %v1210, 0
        %v1316 = vsel %vm431, %v1211, 0
        %v1319 = vsel %vm431, %v1212, 0
        %v1322 = vsel %vm431, %v1213, 0
        %v1325 = vsel %vm431, %v1214, 0
        %v1328 = vsel %vm431, %v1215, 0
        %v1331 = vsel %vm431, %v1216, 0
        %v1334 = vsel %vm431, %v1217, 0
        %v1337 = vsel %vm431, %v1218, 0
        %v1340 = vsel %vm431, %v1219, 0
        %v1343 = vsel %vm431, %v1220, 0
        %v1346 = vsel %vm431, %v1221, 0
        %vm1348 = vcmask 1040384
        %v1350 = vsel %vm1348, %v1286, 0
        %v1353 = vsel %vm1348, %v1287, 0
        %1355 = vmatprep.subr.bf16.mxu0 0
        %1356 = vmatpush1.bf16.msra.mxu0 0
        %1357 = vmatprep.subr.bf16.mxu0 %v1353
        %1358 = vmatpush1.bf16.msra.mxu0 %v1350
        %1359 = vmatprep.subr.bf16.mxu0 %v1285
        %1360 = vmatpush1.bf16.msra.mxu0 %v1284
        %1361 = vmatprep.subr.bf16.mxu0 %v1283
        %1362 = vmatpush1.bf16.msra.mxu0 %v1282
        %1363 = vmatprep.subr.bf16.mxu0 %v1281
        %1364 = vmatpush1.bf16.msra.mxu0 %v1280
        %1365 = vmatprep.subr.bf16.mxu0 %v1279
        %1366 = vmatpush1.bf16.msra.mxu0 %v1278
        %1367 = vmatprep.subr.bf16.mxu0 %v1277
        %1368 = vmatpush1.bf16.msra.mxu0 %v1276
        %1369 = vmatprep.subr.bf16.mxu0 %v1275
        %1370 = vmatpush1.bf16.msra.mxu0 %v1274
        %1371 = vmatprep.subr.bf16.mxu0 0
        %1372 = vmatpush2.bf16.msra.mxu0 0
        %1373 = vmatprep.subr.bf16.mxu0 0
        %1374 = vmatpush2.bf16.msra.mxu0 0
        %1375 = vmatprep.subr.bf16.mxu0 0
        %1376 = vmatpush2.bf16.msra.mxu0 0
        %1377 = vmatprep.subr.bf16.mxu0 0
        %1378 = vmatpush2.bf16.msra.mxu0 0
        %1379 = vmatprep.subr.bf16.mxu0 0
        %1380 = vmatpush2.bf16.msra.mxu0 0
        %1381 = vmatprep.subr.bf16.mxu0 0
        %1382 = vmatpush2.bf16.msra.mxu0 0
        %1383 = vmatprep.subr.bf16.mxu0 0
        %1384 = vmatpush2.bf16.msra.mxu0 0
        %1385 = vmatprep.subr.bf16.mxu0 0
        %1386 = vmatpush2.bf16.msra.mxu0 0
        %1387 = vmatprep.mubr.bf16.mxu0 0
        %1388 = vmatmul.mubr.bf16.gmra.mxu0 %v1301
        %v1389 = vpop.f32.mrf.mxu0
        %v1390 = vadd.f32 0.0, %v1389
        %v1391 = vpop.f32.mrf.mxu0
        %v1392 = vadd.f32 0.0, %v1391
        %v1393 = vpop.f32.mrf.mxu0
        %v1394 = vadd.f32 0.0, %v1393
        %v1395 = vpop.f32.mrf.mxu0
        %v1396 = vadd.f32 0.0, %v1395
        %1397 = vmatprep.mubr.bf16.mxu0 0
        %1398 = vmatmul.mubr.bf16.gmra.mxu0 %v1304
        %v1399 = vpop.f32.mrf.mxu0
        %v1400 = vadd.f32 0.0, %v1399
        %v1401 = vpop.f32.mrf.mxu0
        %v1402 = vadd.f32 0.0, %v1401
        %v1403 = vpop.f32.mrf.mxu0
        %v1404 = vadd.f32 0.0, %v1403
        %v1405 = vpop.f32.mrf.mxu0
        %v1406 = vadd.f32 0.0, %v1405
        %1407 = vmatprep.mubr.bf16.mxu0 0
        %1408 = vmatmul.mubr.bf16.gmra.mxu0 %v1307
        %v1409 = vpop.f32.mrf.mxu0
        %v1410 = vadd.f32 0.0, %v1409
        %v1411 = vpop.f32.mrf.mxu0
        %v1412 = vadd.f32 0.0, %v1411
        %v1413 = vpop.f32.mrf.mxu0
        %v1414 = vadd.f32 0.0, %v1413
        %v1415 = vpop.f32.mrf.mxu0
        %v1416 = vadd.f32 0.0, %v1415
        %1417 = vmatprep.mubr.bf16.mxu0 0
        %1418 = vmatmul.mubr.bf16.gmra.mxu0 %v1310
        %v1419 = vpop.f32.mrf.mxu0
        %v1420 = vadd.f32 0.0, %v1419
        %v1421 = vpop.f32.mrf.mxu0
        %v1422 = vadd.f32 0.0, %v1421
        %v1423 = vpop.f32.mrf.mxu0
        %v1424 = vadd.f32 0.0, %v1423
        %v1425 = vpop.f32.mrf.mxu0
        %v1426 = vadd.f32 0.0, %v1425
        %1427 = vmatprep.mubr.bf16.mxu0 0
        %1428 = vmatmul.mubr.bf16.gmra.mxu0 %v1313
        %v1429 = vpop.f32.mrf.mxu0
        %v1430 = vadd.f32 0.0, %v1429
        %v1431 = vpop.f32.mrf.mxu0
        %v1432 = vadd.f32 0.0, %v1431
        %v1433 = vpop.f32.mrf.mxu0
        %v1434 = vadd.f32 0.0, %v1433
        %v1435 = vpop.f32.mrf.mxu0
        %v1436 = vadd.f32 0.0, %v1435
        %1437 = vmatprep.mubr.bf16.mxu0 0
        %1438 = vmatmul.mubr.bf16.gmra.mxu0 %v1316
        %v1439 = vpop.f32.mrf.mxu0
        %v1440 = vadd.f32 0.0, %v1439
        %v1441 = vpop.f32.mrf.mxu0
        %v1442 = vadd.f32 0.0, %v1441
        %v1443 = vpop.f32.mrf.mxu0
        %v1444 = vadd.f32 0.0, %v1443
        %v1445 = vpop.f32.mrf.mxu0
        %v1446 = vadd.f32 0.0, %v1445
        %1447 = vmatprep.mubr.bf16.mxu0 0
        %1448 = vmatmul.mubr.bf16.gmra.mxu0 %v1319
        %v1449 = vpop.f32.mrf.mxu0
        %v1450 = vadd.f32 0.0, %v1449
        %v1451 = vpop.f32.mrf.mxu0
        %v1452 = vadd.f32 0.0, %v1451
        %v1453 = vpop.f32.mrf.mxu0
        %v1454 = vadd.f32 0.0, %v1453
        %v1455 = vpop.f32.mrf.mxu0
        %v1456 = vadd.f32 0.0, %v1455
        %1457 = vmatprep.mubr.bf16.mxu0 0
        %1458 = vmatmul.mubr.bf16.gmra.mxu0 %v1322
        %v1459 = vpop.f32.mrf.mxu0
        %v1460 = vadd.f32 0.0, %v1459
        %v1461 = vpop.f32.mrf.mxu0
        %v1462 = vadd.f32 0.0, %v1461
        %v1463 = vpop.f32.mrf.mxu0
        %v1464 = vadd.f32 0.0, %v1463
        %v1465 = vpop.f32.mrf.mxu0
        %v1466 = vadd.f32 0.0, %v1465
        %1467 = vmatprep.mubr.bf16.mxu0 0
        %1468 = vmatmul.mubr.bf16.gmra.mxu0 %v1325
        %v1469 = vpop.f32.mrf.mxu0
        %v1470 = vadd.f32 0.0, %v1469
        %v1471 = vpop.f32.mrf.mxu0
        %v1472 = vadd.f32 0.0, %v1471
        %v1473 = vpop.f32.mrf.mxu0
        %v1474 = vadd.f32 0.0, %v1473
        %v1475 = vpop.f32.mrf.mxu0
        %v1476 = vadd.f32 0.0, %v1475
        %1477 = vmatprep.mubr.bf16.mxu0 0
        %1478 = vmatmul.mubr.bf16.gmra.mxu0 %v1328
        %v1479 = vpop.f32.mrf.mxu0
        %v1480 = vadd.f32 0.0, %v1479
        %v1481 = vpop.f32.mrf.mxu0
        %v1482 = vadd.f32 0.0, %v1481
        %v1483 = vpop.f32.mrf.mxu0
        %v1484 = vadd.f32 0.0, %v1483
        %v1485 = vpop.f32.mrf.mxu0
        %v1486 = vadd.f32 0.0, %v1485
        %1487 = vmatprep.mubr.bf16.mxu0 0
        %1488 = vmatmul.mubr.bf16.gmra.mxu0 %v1331
        %v1489 = vpop.f32.mrf.mxu0
        %v1490 = vadd.f32 0.0, %v1489
        %v1491 = vpop.f32.mrf.mxu0
        %v1492 = vadd.f32 0.0, %v1491
        %v1493 = vpop.f32.mrf.mxu0
        %v1494 = vadd.f32 0.0, %v1493
        %v1495 = vpop.f32.mrf.mxu0
        %v1496 = vadd.f32 0.0, %v1495
        %1497 = vmatprep.mubr.bf16.mxu0 0
        %1498 = vmatmul.mubr.bf16.gmra.mxu0 %v1334
        %v1499 = vpop.f32.mrf.mxu0
        %v1500 = vadd.f32 0.0, %v1499
        %v1501 = vpop.f32.mrf.mxu0
        %v1502 = vadd.f32 0.0, %v1501
        %v1503 = vpop.f32.mrf.mxu0
        %v1504 = vadd.f32 0.0, %v1503
        %v1505 = vpop.f32.mrf.mxu0
        %v1506 = vadd.f32 0.0, %v1505
        %1507 = vmatprep.mubr.bf16.mxu0 0
        %1508 = vmatmul.mubr.bf16.gmra.mxu0 %v1337
        %v1509 = vpop.f32.mrf.mxu0
        %v1510 = vadd.f32 0.0, %v1509
        %v1511 = vpop.f32.mrf.mxu0
        %v1512 = vadd.f32 0.0, %v1511
        %v1513 = vpop.f32.mrf.mxu0
        %v1514 = vadd.f32 0.0, %v1513
        %v1515 = vpop.f32.mrf.mxu0
        %v1516 = vadd.f32 0.0, %v1515
        %1517 = vmatprep.mubr.bf16.mxu0 0
        %1518 = vmatmul.mubr.bf16.gmra.mxu0 %v1340
        %v1519 = vpop.f32.mrf.mxu0
        %v1520 = vadd.f32 0.0, %v1519
        %v1521 = vpop.f32.mrf.mxu0
        %v1522 = vadd.f32 0.0, %v1521
        %v1523 = vpop.f32.mrf.mxu0
        %v1524 = vadd.f32 0.0, %v1523
        %v1525 = vpop.f32.mrf.mxu0
        %v1526 = vadd.f32 0.0, %v1525
        %1527 = vmatprep.mubr.bf16.mxu0 0
        %1528 = vmatmul.mubr.bf16.gmra.mxu0 %v1343
        %v1529 = vpop.f32.mrf.mxu0
        %v1530 = vadd.f32 0.0, %v1529
        %v1531 = vpop.f32.mrf.mxu0
        %v1532 = vadd.f32 0.0, %v1531
        %v1533 = vpop.f32.mrf.mxu0
        %v1534 = vadd.f32 0.0, %v1533
        %v1535 = vpop.f32.mrf.mxu0
        %v1536 = vadd.f32 0.0, %v1535
        %1537 = vmatprep.mubr.bf16.mxu0 0
        %1538 = vmatmul.mubr.bf16.gmra.mxu0 %v1346
        %v1539 = vpop.f32.mrf.mxu0
        %v1540 = vadd.f32 0.0, %v1539
        %v1541 = vpop.f32.mrf.mxu0
        %v1542 = vadd.f32 0.0, %v1541
        %v1543 = vpop.f32.mrf.mxu0
        %v1544 = vadd.f32 0.0, %v1543
        %v1545 = vpop.f32.mrf.mxu0
        %v1546 = vadd.f32 0.0, %v1545
        %1547 = vdwg.mxu0
        %v1548 = vmax.f32 %v1390, 0.0
        %v1549 = vmax.f32 %v1392, 0.0
        %v1550 = vmax.f32 %v1394, 0.0
        %v1551 = vmax.f32 %v1396, 0.0
        %v1552 = vmax.f32 %v1400, 0.0
        %v1553 = vmax.f32 %v1402, 0.0
        %v1554 = vmax.f32 %v1404, 0.0
        %v1555 = vmax.f32 %v1406, 0.0
        %v1556 = vmax.f32 %v1410, 0.0
        %v1557 = vmax.f32 %v1412, 0.0
        %v1558 = vmax.f32 %v1414, 0.0
        %v1559 = vmax.f32 %v1416, 0.0
        %v1560 = vmax.f32 %v1420, 0.0
        %v1561 = vmax.f32 %v1422, 0.0
        %v1562 = vmax.f32 %v1424, 0.0
        %v1563 = vmax.f32 %v1426, 0.0
        %v1564 = vmax.f32 %v1430, 0.0
        %v1565 = vmax.f32 %v1432, 0.0
        %v1566 = vmax.f32 %v1434, 0.0
        %v1567 = vmax.f32 %v1436, 0.0
        %v1568 = vmax.f32 %v1440, 0.0
        %v1569 = vmax.f32 %v1442, 0.0
        %v1570 = vmax.f32 %v1444, 0.0
        %v1571 = vmax.f32 %v1446, 0.0
        %v1572 = vmax.f32 %v1450, 0.0
        %v1573 = vmax.f32 %v1452, 0.0
        %v1574 = vmax.f32 %v1454, 0.0
        %v1575 = vmax.f32 %v1456, 0.0
        %v1576 = vmax.f32 %v1460, 0.0
        %v1577 = vmax.f32 %v1462, 0.0
        %v1578 = vmax.f32 %v1464, 0.0
        %v1579 = vmax.f32 %v1466, 0.0
        %v1580 = vmax.f32 %v1470, 0.0
        %v1581 = vmax.f32 %v1472, 0.0
        %v1582 = vmax.f32 %v1474, 0.0
        %v1583 = vmax.f32 %v1476, 0.0
        %v1584 = vmax.f32 %v1480, 0.0
        %v1585 = vmax.f32 %v1482, 0.0
        %v1586 = vmax.f32 %v1484, 0.0
        %v1587 = vmax.f32 %v1486, 0.0
        %v1588 = vmax.f32 %v1490, 0.0
        %v1589 = vmax.f32 %v1492, 0.0
        %v1590 = vmax.f32 %v1494, 0.0
        %v1591 = vmax.f32 %v1496, 0.0
        %v1592 = vmax.f32 %v1500, 0.0
        %v1593 = vmax.f32 %v1502, 0.0
        %v1594 = vmax.f32 %v1504, 0.0
        %v1595 = vmax.f32 %v1506, 0.0
        %v1596 = vmax.f32 %v1510, 0.0
        %v1597 = vmax.f32 %v1512, 0.0
        %v1598 = vmax.f32 %v1514, 0.0
        %v1599 = vmax.f32 %v1516, 0.0
        %v1600 = vmax.f32 %v1520, 0.0
        %v1601 = vmax.f32 %v1522, 0.0
        %v1602 = vmax.f32 %v1524, 0.0
        %v1603 = vmax.f32 %v1526, 0.0
        %v1604 = vmax.f32 %v1530, 0.0
        %v1605 = vmax.f32 %v1532, 0.0
        %v1606 = vmax.f32 %v1534, 0.0
        %v1607 = vmax.f32 %v1536, 0.0
        %v1608 = vmax.f32 %v1540, 0.0
        %v1609 = vmax.f32 %v1542, 0.0
        %v1610 = vmax.f32 %v1544, 0.0
        %v1611 = vmax.f32 %v1546, 0.0
        %v1612 = vpack.c.bf16 %v1550, %v1548
        %v1613 = vpack.c.bf16 %v1551, %v1549
        %v1614 = vpack.c.bf16 %v1554, %v1552
        %v1615 = vpack.c.bf16 %v1555, %v1553
        %v1616 = vpack.c.bf16 %v1558, %v1556
        %v1617 = vpack.c.bf16 %v1559, %v1557
        %v1618 = vpack.c.bf16 %v1562, %v1560
        %v1619 = vpack.c.bf16 %v1563, %v1561
        %v1620 = vpack.c.bf16 %v1566, %v1564
        %v1621 = vpack.c.bf16 %v1567, %v1565
        %v1622 = vpack.c.bf16 %v1570, %v1568
        %v1623 = vpack.c.bf16 %v1571, %v1569
        %v1624 = vpack.c.bf16 %v1574, %v1572
        %v1625 = vpack.c.bf16 %v1575, %v1573
        %v1626 = vpack.c.bf16 %v1578, %v1576
        %v1627 = vpack.c.bf16 %v1579, %v1577
        %v1628 = vpack.c.bf16 %v1582, %v1580
        %v1629 = vpack.c.bf16 %v1583, %v1581
        %v1630 = vpack.c.bf16 %v1586, %v1584
        %v1631 = vpack.c.bf16 %v1587, %v1585
        %v1632 = vpack.c.bf16 %v1590, %v1588
        %v1633 = vpack.c.bf16 %v1591, %v1589
        %v1634 = vpack.c.bf16 %v1594, %v1592
        %v1635 = vpack.c.bf16 %v1595, %v1593
        %v1636 = vpack.c.bf16 %v1598, %v1596
        %v1637 = vpack.c.bf16 %v1599, %v1597
        %v1638 = vpack.c.bf16 %v1602, %v1600
        %v1639 = vpack.c.bf16 %v1603, %v1601
        %v1640 = vpack.c.bf16 %v1606, %v1604
        %v1641 = vpack.c.bf16 %v1607, %v1605
        %v1642 = vpack.c.bf16 %v1610, %v1608
        %v1643 = vpack.c.bf16 %v1611, %v1609
        %v1644 = vld [vmem:[#allocation8] sm:$0xff]
        %v1645 = vld [vmem:[#allocation8 + $0x8] sm:$0xff]
        %v1646 = vld [vmem:[#allocation8 + $0x10] sm:$0xff]
        %v1647 = vld [vmem:[#allocation8 + $0x18] sm:$0xff]
        %v1648 = vld [vmem:[#allocation8 + $0x20] sm:$0xff]
        %v1649 = vld [vmem:[#allocation8 + $0x28] sm:$0xff]
        %v1650 = vld [vmem:[#allocation8 + $0x30] sm:$0xff]
        %v1651 = vld [vmem:[#allocation8 + $0x38] sm:$0xff]
        %v1652 = vld [vmem:[#allocation8 + $0x40] sm:$0xff]
        %v1653 = vld [vmem:[#allocation8 + $0x48] sm:$0xff]
        %v1654 = vld [vmem:[#allocation8 + $0x50] sm:$0xff]
        %v1655 = vld [vmem:[#allocation8 + $0x58] sm:$0xff]
        %v1656 = vld [vmem:[#allocation8 + $0x60] sm:$0xff]
        %v1657 = vld [vmem:[#allocation8 + $0x68] sm:$0xff]
        %v1658 = vld [vmem:[#allocation8 + $0x70] sm:$0xff]
        %v1659 = vld [vmem:[#allocation8 + $0x78] sm:$0xff]
        %v1660 = vld [vmem:[#allocation8 + $0x80] sm:$0xff]
        %v1661 = vld [vmem:[#allocation8 + $0x88] sm:$0xff]
        %v1662 = vld [vmem:[#allocation8 + $0x90] sm:$0xff]
        %v1663 = vld [vmem:[#allocation8 + $0x98] sm:$0xff]
        %v1664 = vld [vmem:[#allocation8 + $0xa0] sm:$0xff]
        %v1665 = vld [vmem:[#allocation8 + $0xa8] sm:$0xff]
        %v1666 = vld [vmem:[#allocation8 + $0xb0] sm:$0xff]
        %v1667 = vld [vmem:[#allocation8 + $0xb8] sm:$0xff]
        %v1668 = vld [vmem:[#allocation8 + $0xc0] sm:$0xff]
        %v1669 = vld [vmem:[#allocation8 + $0xc8] sm:$0xff]
        %v1670 = vld [vmem:[#allocation8 + $0xd0] sm:$0xff]
        %v1671 = vld [vmem:[#allocation8 + $0xd8] sm:$0xff]
        %v1672 = vld [vmem:[#allocation8 + $0xe0] sm:$0xff]
        %v1673 = vld [vmem:[#allocation8 + $0xe8] sm:$0xff]
        %v1674 = vld [vmem:[#allocation8 + $0xf0] sm:$0xff]
        %v1675 = vld [vmem:[#allocation8 + $0xf8] sm:$0xff]
        %v1708 = vunpack.c.l.b16 %v1644
        %v1709 = vunpack.c.h.b16 %v1644
        %v1710 = vunpack.c.l.b16 %v1645
        %v1711 = vunpack.c.h.b16 %v1645
        %v1712 = vunpack.c.l.b16 %v1646
        %v1713 = vunpack.c.h.b16 %v1646
        %v1714 = vunpack.c.l.b16 %v1647
        %v1715 = vunpack.c.h.b16 %v1647
        %v1716 = vunpack.c.l.b16 %v1648
        %v1717 = vunpack.c.h.b16 %v1648
        %v1718 = vunpack.c.l.b16 %v1649
        %v1719 = vunpack.c.h.b16 %v1649
        %v1720 = vunpack.c.l.b16 %v1650
        %v1721 = vunpack.c.h.b16 %v1650
        %v1722 = vunpack.c.l.b16 %v1651
        %v1723 = vunpack.c.h.b16 %v1651
        %v1724 = vunpack.c.l.b16 %v1652
        %v1725 = vunpack.c.h.b16 %v1652
        %v1726 = vunpack.c.l.b16 %v1653
        %v1727 = vunpack.c.h.b16 %v1653
        %v1728 = vunpack.c.l.b16 %v1654
        %v1729 = vunpack.c.h.b16 %v1654
        %v1730 = vunpack.c.l.b16 %v1655
        %v1731 = vunpack.c.h.b16 %v1655
        %v1732 = vunpack.c.l.b16 %v1656
        %v1733 = vunpack.c.h.b16 %v1656
        %v1734 = vunpack.c.l.b16 %v1657
        %v1735 = vunpack.c.h.b16 %v1657
        %v1736 = vunpack.c.l.b16 %v1658
        %v1737 = vunpack.c.h.b16 %v1658
        %v1738 = vunpack.c.l.b16 %v1659
        %v1739 = vunpack.c.h.b16 %v1659
        %v1740 = vunpack.c.l.b16 %v1660
        %v1741 = vunpack.c.h.b16 %v1660
        %v1742 = vunpack.c.l.b16 %v1661
        %v1743 = vunpack.c.h.b16 %v1661
        %v1744 = vunpack.c.l.b16 %v1662
        %v1745 = vunpack.c.h.b16 %v1662
        %v1746 = vunpack.c.l.b16 %v1663
        %v1747 = vunpack.c.h.b16 %v1663
        %v1748 = vunpack.c.l.b16 %v1664
        %v1749 = vunpack.c.h.b16 %v1664
        %v1750 = vunpack.c.l.b16 %v1665
        %v1751 = vunpack.c.h.b16 %v1665
        %v1752 = vunpack.c.l.b16 %v1666
        %v1753 = vunpack.c.h.b16 %v1666
        %v1754 = vunpack.c.l.b16 %v1667
        %v1755 = vunpack.c.h.b16 %v1667
        %v1756 = vunpack.c.l.b16 %v1668
        %v1757 = vunpack.c.h.b16 %v1668
        %v1758 = vunpack.c.l.b16 %v1669
        %v1759 = vunpack.c.h.b16 %v1669
        %v1760 = vunpack.c.l.b16 %v1670
        %v1761 = vunpack.c.h.b16 %v1670
        %v1762 = vunpack.c.l.b16 %v1671
        %v1763 = vunpack.c.h.b16 %v1671
        %v1764 = vunpack.c.l.b16 %v1672
        %v1765 = vunpack.c.h.b16 %v1672
        %v1766 = vunpack.c.l.b16 %v1673
        %v1767 = vunpack.c.h.b16 %v1673
        %v1768 = vunpack.c.l.b16 %v1674
        %v1769 = vunpack.c.h.b16 %v1674
        %v1770 = vunpack.c.l.b16 %v1675
        %v1771 = vunpack.c.h.b16 %v1675
        %v1772 = vpack.c.b16 %v1710, %v1708
        %v1773 = vpack.c.b16 %v1711, %v1709
        %v1774 = vpack.c.b16 %v1714, %v1712
        %v1775 = vpack.c.b16 %v1715, %v1713
        %v1776 = vpack.c.b16 %v1718, %v1716
        %v1777 = vpack.c.b16 %v1719, %v1717
        %v1778 = vpack.c.b16 %v1722, %v1720
        %v1779 = vpack.c.b16 %v1723, %v1721
        %v1780 = vpack.c.b16 %v1726, %v1724
        %v1781 = vpack.c.b16 %v1727, %v1725
        %v1782 = vpack.c.b16 %v1730, %v1728
        %v1783 = vpack.c.b16 %v1731, %v1729
        %v1784 = vpack.c.b16 %v1734, %v1732
        %v1785 = vpack.c.b16 %v1735, %v1733
        %v1786 = vpack.c.b16 %v1738, %v1736
        %v1787 = vpack.c.b16 %v1739, %v1737
        %v1788 = vpack.c.b16 %v1742, %v1740
        %v1789 = vpack.c.b16 %v1743, %v1741
        %v1790 = vpack.c.b16 %v1746, %v1744
        %v1791 = vpack.c.b16 %v1747, %v1745
        %v1792 = vpack.c.b16 %v1750, %v1748
        %v1793 = vpack.c.b16 %v1751, %v1749
        %v1794 = vpack.c.b16 %v1754, %v1752
        %v1795 = vpack.c.b16 %v1755, %v1753
        %v1796 = vpack.c.b16 %v1758, %v1756
        %v1797 = vpack.c.b16 %v1759, %v1757
        %v1798 = vpack.c.b16 %v1762, %v1760
        %v1799 = vpack.c.b16 %v1763, %v1761
        %v1800 = vpack.c.b16 %v1766, %v1764
        %v1801 = vpack.c.b16 %v1767, %v1765
        %v1802 = vpack.c.b16 %v1770, %v1768
        %v1803 = vpack.c.b16 %v1771, %v1769
        %1836 = vmatprep.subr.bf16.mxu0 %v1787
        %1837 = vmatpush1.bf16.msra.mxu0 %v1786
        %1838 = vmatprep.subr.bf16.mxu0 %v1785
        %1839 = vmatpush1.bf16.msra.mxu0 %v1784
        %1840 = vmatprep.subr.bf16.mxu0 %v1783
        %1841 = vmatpush1.bf16.msra.mxu0 %v1782
        %1842 = vmatprep.subr.bf16.mxu0 %v1781
        %1843 = vmatpush1.bf16.msra.mxu0 %v1780
        %1844 = vmatprep.subr.bf16.mxu0 %v1779
        %1845 = vmatpush1.bf16.msra.mxu0 %v1778
        %1846 = vmatprep.subr.bf16.mxu0 %v1777
        %1847 = vmatpush1.bf16.msra.mxu0 %v1776
        %1848 = vmatprep.subr.bf16.mxu0 %v1775
        %1849 = vmatpush1.bf16.msra.mxu0 %v1774
        %1850 = vmatprep.subr.bf16.mxu0 %v1773
        %1851 = vmatpush1.bf16.msra.mxu0 %v1772
        %1852 = vmatprep.subr.bf16.mxu0 %v1803
        %1853 = vmatpush2.bf16.msra.mxu0 %v1802
        %1854 = vmatprep.subr.bf16.mxu0 %v1801
        %1855 = vmatpush2.bf16.msra.mxu0 %v1800
        %1856 = vmatprep.subr.bf16.mxu0 %v1799
        %1857 = vmatpush2.bf16.msra.mxu0 %v1798
        %1858 = vmatprep.subr.bf16.mxu0 %v1797
        %1859 = vmatpush2.bf16.msra.mxu0 %v1796
        %1860 = vmatprep.subr.bf16.mxu0 %v1795
        %1861 = vmatpush2.bf16.msra.mxu0 %v1794
        %1862 = vmatprep.subr.bf16.mxu0 %v1793
        %1863 = vmatpush2.bf16.msra.mxu0 %v1792
        %1864 = vmatprep.subr.bf16.mxu0 %v1791
        %1865 = vmatpush2.bf16.msra.mxu0 %v1790
        %1866 = vmatprep.subr.bf16.mxu0 %v1789
        %1867 = vmatpush2.bf16.msra.mxu0 %v1788
        %1868 = vmatprep.mubr.bf16.mxu0 %v1613
        %1869 = vmatmul.mubr.bf16.gmra.mxu0 %v1612
        %v1870 = vpop.f32.mrf.mxu0
        %v1871 = vadd.f32 0.0, %v1870
        %v1872 = vpop.f32.mrf.mxu0
        %v1873 = vadd.f32 0.0, %v1872
        %v1874 = vpop.f32.mrf.mxu0
        %v1875 = vadd.f32 0.0, %v1874
        %v1876 = vpop.f32.mrf.mxu0
        %v1877 = vadd.f32 0.0, %v1876
        %1878 = vmatprep.mubr.bf16.mxu0 %v1615
        %1879 = vmatmul.mubr.bf16.gmra.mxu0 %v1614
        %v1880 = vpop.f32.mrf.mxu0
        %v1881 = vadd.f32 0.0, %v1880
        %v1882 = vpop.f32.mrf.mxu0
        %v1883 = vadd.f32 0.0, %v1882
        %v1884 = vpop.f32.mrf.mxu0
        %v1885 = vadd.f32 0.0, %v1884
        %v1886 = vpop.f32.mrf.mxu0
        %v1887 = vadd.f32 0.0, %v1886
        %1888 = vmatprep.mubr.bf16.mxu0 %v1617
        %1889 = vmatmul.mubr.bf16.gmra.mxu0 %v1616
        %v1890 = vpop.f32.mrf.mxu0
        %v1891 = vadd.f32 0.0, %v1890
        %v1892 = vpop.f32.mrf.mxu0
        %v1893 = vadd.f32 0.0, %v1892
        %v1894 = vpop.f32.mrf.mxu0
        %v1895 = vadd.f32 0.0, %v1894
        %v1896 = vpop.f32.mrf.mxu0
        %v1897 = vadd.f32 0.0, %v1896
        %1898 = vmatprep.mubr.bf16.mxu0 %v1619
        %1899 = vmatmul.mubr.bf16.gmra.mxu0 %v1618
        %v1900 = vpop.f32.mrf.mxu0
        %v1901 = vadd.f32 0.0, %v1900
        %v1902 = vpop.f32.mrf.mxu0
        %v1903 = vadd.f32 0.0, %v1902
        %v1904 = vpop.f32.mrf.mxu0
        %v1905 = vadd.f32 0.0, %v1904
        %v1906 = vpop.f32.mrf.mxu0
        %v1907 = vadd.f32 0.0, %v1906
        %1908 = vmatprep.mubr.bf16.mxu0 %v1621
        %1909 = vmatmul.mubr.bf16.gmra.mxu0 %v1620
        %v1910 = vpop.f32.mrf.mxu0
        %v1911 = vadd.f32 0.0, %v1910
        %v1912 = vpop.f32.mrf.mxu0
        %v1913 = vadd.f32 0.0, %v1912
        %v1914 = vpop.f32.mrf.mxu0
        %v1915 = vadd.f32 0.0, %v1914
        %v1916 = vpop.f32.mrf.mxu0
        %v1917 = vadd.f32 0.0, %v1916
        %1918 = vmatprep.mubr.bf16.mxu0 %v1623
        %1919 = vmatmul.mubr.bf16.gmra.mxu0 %v1622
        %v1920 = vpop.f32.mrf.mxu0
        %v1921 = vadd.f32 0.0, %v1920
        %v1922 = vpop.f32.mrf.mxu0
        %v1923 = vadd.f32 0.0, %v1922
        %v1924 = vpop.f32.mrf.mxu0
        %v1925 = vadd.f32 0.0, %v1924
        %v1926 = vpop.f32.mrf.mxu0
        %v1927 = vadd.f32 0.0, %v1926
        %1928 = vmatprep.mubr.bf16.mxu0 %v1625
        %1929 = vmatmul.mubr.bf16.gmra.mxu0 %v1624
        %v1930 = vpop.f32.mrf.mxu0
        %v1931 = vadd.f32 0.0, %v1930
        %v1932 = vpop.f32.mrf.mxu0
        %v1933 = vadd.f32 0.0, %v1932
        %v1934 = vpop.f32.mrf.mxu0
        %v1935 = vadd.f32 0.0, %v1934
        %v1936 = vpop.f32.mrf.mxu0
        %v1937 = vadd.f32 0.0, %v1936
        %1938 = vmatprep.mubr.bf16.mxu0 %v1627
        %1939 = vmatmul.mubr.bf16.gmra.mxu0 %v1626
        %v1940 = vpop.f32.mrf.mxu0
        %v1941 = vadd.f32 0.0, %v1940
        %v1942 = vpop.f32.mrf.mxu0
        %v1943 = vadd.f32 0.0, %v1942
        %v1944 = vpop.f32.mrf.mxu0
        %v1945 = vadd.f32 0.0, %v1944
        %v1946 = vpop.f32.mrf.mxu0
        %v1947 = vadd.f32 0.0, %v1946
        %1948 = vmatprep.mubr.bf16.mxu0 %v1629
        %1949 = vmatmul.mubr.bf16.gmra.mxu0 %v1628
        %v1950 = vpop.f32.mrf.mxu0
        %v1951 = vadd.f32 0.0, %v1950
        %v1952 = vpop.f32.mrf.mxu0
        %v1953 = vadd.f32 0.0, %v1952
        %v1954 = vpop.f32.mrf.mxu0
        %v1955 = vadd.f32 0.0, %v1954
        %v1956 = vpop.f32.mrf.mxu0
        %v1957 = vadd.f32 0.0, %v1956
        %1958 = vmatprep.mubr.bf16.mxu0 %v1631
        %1959 = vmatmul.mubr.bf16.gmra.mxu0 %v1630
        %v1960 = vpop.f32.mrf.mxu0
        %v1961 = vadd.f32 0.0, %v1960
        %v1962 = vpop.f32.mrf.mxu0
        %v1963 = vadd.f32 0.0, %v1962
        %v1964 = vpop.f32.mrf.mxu0
        %v1965 = vadd.f32 0.0, %v1964
        %v1966 = vpop.f32.mrf.mxu0
        %v1967 = vadd.f32 0.0, %v1966
        %1968 = vmatprep.mubr.bf16.mxu0 %v1633
        %1969 = vmatmul.mubr.bf16.gmra.mxu0 %v1632
        %v1970 = vpop.f32.mrf.mxu0
        %v1971 = vadd.f32 0.0, %v1970
        %v1972 = vpop.f32.mrf.mxu0
        %v1973 = vadd.f32 0.0, %v1972
        %v1974 = vpop.f32.mrf.mxu0
        %v1975 = vadd.f32 0.0, %v1974
        %v1976 = vpop.f32.mrf.mxu0
        %v1977 = vadd.f32 0.0, %v1976
        %1978 = vmatprep.mubr.bf16.mxu0 %v1635
        %1979 = vmatmul.mubr.bf16.gmra.mxu0 %v1634
        %v1980 = vpop.f32.mrf.mxu0
        %v1981 = vadd.f32 0.0, %v1980
        %v1982 = vpop.f32.mrf.mxu0
        %v1983 = vadd.f32 0.0, %v1982
        %v1984 = vpop.f32.mrf.mxu0
        %v1985 = vadd.f32 0.0, %v1984
        %v1986 = vpop.f32.mrf.mxu0
        %v1987 = vadd.f32 0.0, %v1986
        %1988 = vmatprep.mubr.bf16.mxu0 %v1637
        %1989 = vmatmul.mubr.bf16.gmra.mxu0 %v1636
        %v1990 = vpop.f32.mrf.mxu0
        %v1991 = vadd.f32 0.0, %v1990
        %v1992 = vpop.f32.mrf.mxu0
        %v1993 = vadd.f32 0.0, %v1992
        %v1994 = vpop.f32.mrf.mxu0
        %v1995 = vadd.f32 0.0, %v1994
        %v1996 = vpop.f32.mrf.mxu0
        %v1997 = vadd.f32 0.0, %v1996
        %1998 = vmatprep.mubr.bf16.mxu0 %v1639
        %1999 = vmatmul.mubr.bf16.gmra.mxu0 %v1638
        %v2000 = vpop.f32.mrf.mxu0
        %v2001 = vadd.f32 0.0, %v2000
        %v2002 = vpop.f32.mrf.mxu0
        %v2003 = vadd.f32 0.0, %v2002
        %v2004 = vpop.f32.mrf.mxu0
        %v2005 = vadd.f32 0.0, %v2004
        %v2006 = vpop.f32.mrf.mxu0
        %v2007 = vadd.f32 0.0, %v2006
        %2008 = vmatprep.mubr.bf16.mxu0 %v1641
        %2009 = vmatmul.mubr.bf16.gmra.mxu0 %v1640
        %v2010 = vpop.f32.mrf.mxu0
        %v2011 = vadd.f32 0.0, %v2010
        %v2012 = vpop.f32.mrf.mxu0
        %v2013 = vadd.f32 0.0, %v2012
        %v2014 = vpop.f32.mrf.mxu0
        %v2015 = vadd.f32 0.0, %v2014
        %v2016 = vpop.f32.mrf.mxu0
        %v2017 = vadd.f32 0.0, %v2016
        %2018 = vmatprep.mubr.bf16.mxu0 %v1643
        %2019 = vmatmul.mubr.bf16.gmra.mxu0 %v1642
        %v2020 = vpop.f32.mrf.mxu0
        %v2021 = vadd.f32 0.0, %v2020
        %v2022 = vpop.f32.mrf.mxu0
        %v2023 = vadd.f32 0.0, %v2022
        %v2024 = vpop.f32.mrf.mxu0
        %v2025 = vadd.f32 0.0, %v2024
        %v2026 = vpop.f32.mrf.mxu0
        %v2027 = vadd.f32 0.0, %v2026
        %2028 = vdwg.mxu0
        %v2029 = vadd.f32 %v1548, %v1549
        %2030 = vadd.xlane.f32.xlu0 %v2029
        %v2031 = vpop.xlane.xlu0 %2030
        %v2032 = vadd.f32 %v1550, %v1551
        %2033 = vadd.xlane.f32.xlu0 %v2032
        %v2034 = vpop.xlane.xlu0 %2033
        %v2035 = vadd.f32 %v1552, %v1553
        %2036 = vadd.xlane.f32.xlu0 %v2035
        %v2037 = vpop.xlane.xlu0 %2036
        %v2038 = vadd.f32 %v1554, %v1555
        %2039 = vadd.xlane.f32.xlu0 %v2038
        %v2040 = vpop.xlane.xlu0 %2039
        %v2041 = vadd.f32 %v1556, %v1557
        %2042 = vadd.xlane.f32.xlu0 %v2041
        %v2043 = vpop.xlane.xlu0 %2042
        %v2044 = vadd.f32 %v1558, %v1559
        %2045 = vadd.xlane.f32.xlu0 %v2044
        %v2046 = vpop.xlane.xlu0 %2045
        %v2047 = vadd.f32 %v1560, %v1561
        %2048 = vadd.xlane.f32.xlu0 %v2047
        %v2049 = vpop.xlane.xlu0 %2048
        %v2050 = vadd.f32 %v1562, %v1563
        %2051 = vadd.xlane.f32.xlu0 %v2050
        %v2052 = vpop.xlane.xlu0 %2051
        %v2053 = vadd.f32 %v1564, %v1565
        %2054 = vadd.xlane.f32.xlu0 %v2053
        %v2055 = vpop.xlane.xlu0 %2054
        %v2056 = vadd.f32 %v1566, %v1567
        %2057 = vadd.xlane.f32.xlu0 %v2056
        %v2058 = vpop.xlane.xlu0 %2057
        %v2059 = vadd.f32 %v1568, %v1569
        %2060 = vadd.xlane.f32.xlu0 %v2059
        %v2061 = vpop.xlane.xlu0 %2060
        %v2062 = vadd.f32 %v1570, %v1571
        %2063 = vadd.xlane.f32.xlu0 %v2062
        %v2064 = vpop.xlane.xlu0 %2063
        %v2065 = vadd.f32 %v1572, %v1573
        %2066 = vadd.xlane.f32.xlu0 %v2065
        %v2067 = vpop.xlane.xlu0 %2066
        %v2068 = vadd.f32 %v1574, %v1575
        %2069 = vadd.xlane.f32.xlu0 %v2068
        %v2070 = vpop.xlane.xlu0 %2069
        %v2071 = vadd.f32 %v1576, %v1577
        %2072 = vadd.xlane.f32.xlu0 %v2071
        %v2073 = vpop.xlane.xlu0 %2072
        %v2074 = vadd.f32 %v1578, %v1579
        %2075 = vadd.xlane.f32.xlu0 %v2074
        %v2076 = vpop.xlane.xlu0 %2075
        %v2077 = vadd.f32 %v1580, %v1581
        %2078 = vadd.xlane.f32.xlu0 %v2077
        %v2079 = vpop.xlane.xlu0 %2078
        %v2080 = vadd.f32 %v1582, %v1583
        %2081 = vadd.xlane.f32.xlu0 %v2080
        %v2082 = vpop.xlane.xlu0 %2081
        %v2083 = vadd.f32 %v1584, %v1585
        %2084 = vadd.xlane.f32.xlu0 %v2083
        %v2085 = vpop.xlane.xlu0 %2084
        %v2086 = vadd.f32 %v1586, %v1587
        %2087 = vadd.xlane.f32.xlu0 %v2086
        %v2088 = vpop.xlane.xlu0 %2087
        %v2089 = vadd.f32 %v1588, %v1589
        %2090 = vadd.xlane.f32.xlu0 %v2089
        %v2091 = vpop.xlane.xlu0 %2090
        %v2092 = vadd.f32 %v1590, %v1591
        %2093 = vadd.xlane.f32.xlu0 %v2092
        %v2094 = vpop.xlane.xlu0 %2093
        %v2095 = vadd.f32 %v1592, %v1593
        %2096 = vadd.xlane.f32.xlu0 %v2095
        %v2097 = vpop.xlane.xlu0 %2096
        %v2098 = vadd.f32 %v1594, %v1595
        %2099 = vadd.xlane.f32.xlu0 %v2098
        %v2100 = vpop.xlane.xlu0 %2099
        %v2101 = vadd.f32 %v1596, %v1597
        %2102 = vadd.xlane.f32.xlu0 %v2101
        %v2103 = vpop.xlane.xlu0 %2102
        %v2104 = vadd.f32 %v1598, %v1599
        %2105 = vadd.xlane.f32.xlu0 %v2104
        %v2106 = vpop.xlane.xlu0 %2105
        %v2107 = vadd.f32 %v1600, %v1601
        %2108 = vadd.xlane.f32.xlu0 %v2107
        %v2109 = vpop.xlane.xlu0 %2108
        %v2110 = vadd.f32 %v1602, %v1603
        %2111 = vadd.xlane.f32.xlu0 %v2110
        %v2112 = vpop.xlane.xlu0 %2111
        %v2113 = vadd.f32 %v1604, %v1605
        %2114 = vadd.xlane.f32.xlu0 %v2113
        %v2115 = vpop.xlane.xlu0 %2114
        %v2116 = vadd.f32 %v1606, %v1607
        %2117 = vadd.xlane.f32.xlu0 %v2116
        %v2118 = vpop.xlane.xlu0 %2117
        %v2119 = vadd.f32 %v1608, %v1609
        %2120 = vadd.xlane.f32.xlu0 %v2119
        %v2121 = vpop.xlane.xlu0 %2120
        %v2122 = vadd.f32 %v1610, %v1611
        %2123 = vadd.xlane.f32.xlu0 %v2122
        %v2124 = vpop.xlane.xlu0 %2123
        %v2125 = vrcp.pop 256.0
        %v2126 = vmul.f32 %v2031, %v2125
        %v2127 = vmul.f32 %v2034, %v2125
        %v2128 = vmul.f32 %v2037, %v2125
        %v2129 = vmul.f32 %v2040, %v2125
        %v2130 = vmul.f32 %v2043, %v2125
        %v2131 = vmul.f32 %v2046, %v2125
        %v2132 = vmul.f32 %v2049, %v2125
        %v2133 = vmul.f32 %v2052, %v2125
        %v2134 = vmul.f32 %v2055, %v2125
        %v2135 = vmul.f32 %v2058, %v2125
        %v2136 = vmul.f32 %v2061, %v2125
        %v2137 = vmul.f32 %v2064, %v2125
        %v2138 = vmul.f32 %v2067, %v2125
        %v2139 = vmul.f32 %v2070, %v2125
        %v2140 = vmul.f32 %v2073, %v2125
        %v2141 = vmul.f32 %v2076, %v2125
        %v2142 = vmul.f32 %v2079, %v2125
        %v2143 = vmul.f32 %v2082, %v2125
        %v2144 = vmul.f32 %v2085, %v2125
        %v2145 = vmul.f32 %v2088, %v2125
        %v2146 = vmul.f32 %v2091, %v2125
        %v2147 = vmul.f32 %v2094, %v2125
        %v2148 = vmul.f32 %v2097, %v2125
        %v2149 = vmul.f32 %v2100, %v2125
        %v2150 = vmul.f32 %v2103, %v2125
        %v2151 = vmul.f32 %v2106, %v2125
        %v2152 = vmul.f32 %v2109, %v2125
        %v2153 = vmul.f32 %v2112, %v2125
        %v2154 = vmul.f32 %v2115, %v2125
        %v2155 = vmul.f32 %v2118, %v2125
        %v2156 = vmul.f32 %v2121, %v2125
        %v2157 = vmul.f32 %v2124, %v2125
        %v2158 = vsub.f32 %v1548, %v2126
        %v2159 = vsub.f32 %v1549, %v2126
        %v2160 = vsub.f32 %v1550, %v2127
        %v2161 = vsub.f32 %v1551, %v2127
        %v2162 = vsub.f32 %v1552, %v2128
        %v2163 = vsub.f32 %v1553, %v2128
        %v2164 = vsub.f32 %v1554, %v2129
        %v2165 = vsub.f32 %v1555, %v2129
        %v2166 = vsub.f32 %v1556, %v2130
        %v2167 = vsub.f32 %v1557, %v2130
        %v2168 = vsub.f32 %v1558, %v2131
        %v2169 = vsub.f32 %v1559, %v2131
        %v2170 = vsub.f32 %v1560, %v2132
        %v2171 = vsub.f32 %v1561, %v2132
        %v2172 = vsub.f32 %v1562, %v2133
        %v2173 = vsub.f32 %v1563, %v2133
        %v2174 = vsub.f32 %v1564, %v2134
        %v2175 = vsub.f32 %v1565, %v2134
        %v2176 = vsub.f32 %v1566, %v2135
        %v2177 = vsub.f32 %v1567, %v2135
        %v2178 = vsub.f32 %v1568, %v2136
        %v2179 = vsub.f32 %v1569, %v2136
        %v2180 = vsub.f32 %v1570, %v2137
        %v2181 = vsub.f32 %v1571, %v2137
        %v2182 = vsub.f32 %v1572, %v2138
        %v2183 = vsub.f32 %v1573, %v2138
        %v2184 = vsub.f32 %v1574, %v2139
        %v2185 = vsub.f32 %v1575, %v2139
        %v2186 = vsub.f32 %v1576, %v2140
        %v2187 = vsub.f32 %v1577, %v2140
        %v2188 = vsub.f32 %v1578, %v2141
        %v2189 = vsub.f32 %v1579, %v2141
        %v2190 = vsub.f32 %v1580, %v2142
        %v2191 = vsub.f32 %v1581, %v2142
        %v2192 = vsub.f32 %v1582, %v2143
        %v2193 = vsub.f32 %v1583, %v2143
        %v2194 = vsub.f32 %v1584, %v2144
        %v2195 = vsub.f32 %v1585, %v2144
        %v2196 = vsub.f32 %v1586, %v2145
        %v2197 = vsub.f32 %v1587, %v2145
        %v2198 = vsub.f32 %v1588, %v2146
        %v2199 = vsub.f32 %v1589, %v2146
        %v2200 = vsub.f32 %v1590, %v2147
        %v2201 = vsub.f32 %v1591, %v2147
        %v2202 = vsub.f32 %v1592, %v2148
        %v2203 = vsub.f32 %v1593, %v2148
        %v2204 = vsub.f32 %v1594, %v2149
        %v2205 = vsub.f32 %v1595, %v2149
        %v2206 = vsub.f32 %v1596, %v2150
        %v2207 = vsub.f32 %v1597, %v2150
        %v2208 = vsub.f32 %v1598, %v2151
        %v2209 = vsub.f32 %v1599, %v2151
        %v2210 = vsub.f32 %v1600, %v2152
        %v2211 = vsub.f32 %v1601, %v2152
        %v2212 = vsub.f32 %v1602, %v2153
        %v2213 = vsub.f32 %v1603, %v2153
        %v2214 = vsub.f32 %v1604, %v2154
        %v2215 = vsub.f32 %v1605, %v2154
        %v2216 = vsub.f32 %v1606, %v2155
        %v2217 = vsub.f32 %v1607, %v2155
        %v2218 = vsub.f32 %v1608, %v2156
        %v2219 = vsub.f32 %v1609, %v2156
        %v2220 = vsub.f32 %v1610, %v2157
        %v2221 = vsub.f32 %v1611, %v2157
        %v2222 = vmul.f32 %v2158, %v2158
        %v2223 = vmul.f32 %v2159, %v2159
        %v2224 = vmul.f32 %v2160, %v2160
        %v2225 = vmul.f32 %v2161, %v2161
        %v2226 = vmul.f32 %v2162, %v2162
        %v2227 = vmul.f32 %v2163, %v2163
        %v2228 = vmul.f32 %v2164, %v2164
        %v2229 = vmul.f32 %v2165, %v2165
        %v2230 = vmul.f32 %v2166, %v2166
        %v2231 = vmul.f32 %v2167, %v2167
        %v2232 = vmul.f32 %v2168, %v2168
        %v2233 = vmul.f32 %v2169, %v2169
        %v2234 = vmul.f32 %v2170, %v2170
        %v2235 = vmul.f32 %v2171, %v2171
        %v2236 = vmul.f32 %v2172, %v2172
        %v2237 = vmul.f32 %v2173, %v2173
        %v2238 = vmul.f32 %v2174, %v2174
        %v2239 = vmul.f32 %v2175, %v2175
        %v2240 = vmul.f32 %v2176, %v2176
        %v2241 = vmul.f32 %v2177, %v2177
        %v2242 = vmul.f32 %v2178, %v2178
        %v2243 = vmul.f32 %v2179, %v2179
        %v2244 = vmul.f32 %v2180, %v2180
        %v2245 = vmul.f32 %v2181, %v2181
        %v2246 = vmul.f32 %v2182, %v2182
        %v2247 = vmul.f32 %v2183, %v2183
        %v2248 = vmul.f32 %v2184, %v2184
        %v2249 = vmul.f32 %v2185, %v2185
        %v2250 = vmul.f32 %v2186, %v2186
        %v2251 = vmul.f32 %v2187, %v2187
        %v2252 = vmul.f32 %v2188, %v2188
        %v2253 = vmul.f32 %v2189, %v2189
        %v2254 = vmul.f32 %v2190, %v2190
        %v2255 = vmul.f32 %v2191, %v2191
        %v2256 = vmul.f32 %v2192, %v2192
        %v2257 = vmul.f32 %v2193, %v2193
        %v2258 = vmul.f32 %v2194, %v2194
        %v2259 = vmul.f32 %v2195, %v2195
        %v2260 = vmul.f32 %v2196, %v2196
        %v2261 = vmul.f32 %v2197, %v2197
        %v2262 = vmul.f32 %v2198, %v2198
        %v2263 = vmul.f32 %v2199, %v2199
        %v2264 = vmul.f32 %v2200, %v2200
        %v2265 = vmul.f32 %v2201, %v2201
        %v2266 = vmul.f32 %v2202, %v2202
        %v2267 = vmul.f32 %v2203, %v2203
        %v2268 = vmul.f32 %v2204, %v2204
        %v2269 = vmul.f32 %v2205, %v2205
        %v2270 = vmul.f32 %v2206, %v2206
        %v2271 = vmul.f32 %v2207, %v2207
        %v2272 = vmul.f32 %v2208, %v2208
        %v2273 = vmul.f32 %v2209, %v2209
        %v2274 = vmul.f32 %v2210, %v2210
        %v2275 = vmul.f32 %v2211, %v2211
        %v2276 = vmul.f32 %v2212, %v2212
        %v2277 = vmul.f32 %v2213, %v2213
        %v2278 = vmul.f32 %v2214, %v2214
        %v2279 = vmul.f32 %v2215, %v2215
        %v2280 = vmul.f32 %v2216, %v2216
        %v2281 = vmul.f32 %v2217, %v2217
        %v2282 = vmul.f32 %v2218, %v2218
        %v2283 = vmul.f32 %v2219, %v2219
        %v2284 = vmul.f32 %v2220, %v2220
        %v2285 = vmul.f32 %v2221, %v2221
        %v2286 = vadd.f32 %v2222, %v2223
        %2287 = vadd.xlane.f32.xlu0 %v2286
        %v2288 = vpop.xlane.xlu0 %2287
        %v2289 = vadd.f32 %v2224, %v2225
        %2290 = vadd.xlane.f32.xlu0 %v2289
        %v2291 = vpop.xlane.xlu0 %2290
        %v2292 = vadd.f32 %v2226, %v2227
        %2293 = vadd.xlane.f32.xlu0 %v2292
        %v2294 = vpop.xlane.xlu0 %2293
        %v2295 = vadd.f32 %v2228, %v2229
        %2296 = vadd.xlane.f32.xlu0 %v2295
        %v2297 = vpop.xlane.xlu0 %2296
        %v2298 = vadd.f32 %v2230, %v2231
        %2299 = vadd.xlane.f32.xlu0 %v2298
        %v2300 = vpop.xlane.xlu0 %2299
        %v2301 = vadd.f32 %v2232, %v2233
        %2302 = vadd.xlane.f32.xlu0 %v2301
        %v2303 = vpop.xlane.xlu0 %2302
        %v2304 = vadd.f32 %v2234, %v2235
        %2305 = vadd.xlane.f32.xlu0 %v2304
        %v2306 = vpop.xlane.xlu0 %2305
        %v2307 = vadd.f32 %v2236, %v2237
        %2308 = vadd.xlane.f32.xlu0 %v2307
        %v2309 = vpop.xlane.xlu0 %2308
        %v2310 = vadd.f32 %v2238, %v2239
        %2311 = vadd.xlane.f32.xlu0 %v2310
        %v2312 = vpop.xlane.xlu0 %2311
        %v2313 = vadd.f32 %v2240, %v2241
        %2314 = vadd.xlane.f32.xlu0 %v2313
        %v2315 = vpop.xlane.xlu0 %2314
        %v2316 = vadd.f32 %v2242, %v2243
        %2317 = vadd.xlane.f32.xlu0 %v2316
        %v2318 = vpop.xlane.xlu0 %2317
        %v2319 = vadd.f32 %v2244, %v2245
        %2320 = vadd.xlane.f32.xlu0 %v2319
        %v2321 = vpop.xlane.xlu0 %2320
        %v2322 = vadd.f32 %v2246, %v2247
        %2323 = vadd.xlane.f32.xlu0 %v2322
        %v2324 = vpop.xlane.xlu0 %2323
        %v2325 = vadd.f32 %v2248, %v2249
        %2326 = vadd.xlane.f32.xlu0 %v2325
        %v2327 = vpop.xlane.xlu0 %2326
        %v2328 = vadd.f32 %v2250, %v2251
        %2329 = vadd.xlane.f32.xlu0 %v2328
        %v2330 = vpop.xlane.xlu0 %2329
        %v2331 = vadd.f32 %v2252, %v2253
        %2332 = vadd.xlane.f32.xlu0 %v2331
        %v2333 = vpop.xlane.xlu0 %2332
        %v2334 = vadd.f32 %v2254, %v2255
        %2335 = vadd.xlane.f32.xlu0 %v2334
        %v2336 = vpop.xlane.xlu0 %2335
        %v2337 = vadd.f32 %v2256, %v2257
        %2338 = vadd.xlane.f32.xlu0 %v2337
        %v2339 = vpop.xlane.xlu0 %2338
        %v2340 = vadd.f32 %v2258, %v2259
        %2341 = vadd.xlane.f32.xlu0 %v2340
        %v2342 = vpop.xlane.xlu0 %2341
        %v2343 = vadd.f32 %v2260, %v2261
        %2344 = vadd.xlane.f32.xlu0 %v2343
        %v2345 = vpop.xlane.xlu0 %2344
        %v2346 = vadd.f32 %v2262, %v2263
        %2347 = vadd.xlane.f32.xlu0 %v2346
        %v2348 = vpop.xlane.xlu0 %2347
        %v2349 = vadd.f32 %v2264, %v2265
        %2350 = vadd.xlane.f32.xlu0 %v2349
        %v2351 = vpop.xlane.xlu0 %2350
        %v2352 = vadd.f32 %v2266, %v2267
        %2353 = vadd.xlane.f32.xlu0 %v2352
        %v2354 = vpop.xlane.xlu0 %2353
        %v2355 = vadd.f32 %v2268, %v2269
        %2356 = vadd.xlane.f32.xlu0 %v2355
        %v2357 = vpop.xlane.xlu0 %2356
        %v2358 = vadd.f32 %v2270, %v2271
        %2359 = vadd.xlane.f32.xlu0 %v2358
        %v2360 = vpop.xlane.xlu0 %2359
        %v2361 = vadd.f32 %v2272, %v2273
        %2362 = vadd.xlane.f32.xlu0 %v2361
        %v2363 = vpop.xlane.xlu0 %2362
        %v2364 = vadd.f32 %v2274, %v2275
        %2365 = vadd.xlane.f32.xlu0 %v2364
        %v2366 = vpop.xlane.xlu0 %2365
        %v2367 = vadd.f32 %v2276, %v2277
        %2368 = vadd.xlane.f32.xlu0 %v2367
        %v2369 = vpop.xlane.xlu0 %2368
        %v2370 = vadd.f32 %v2278, %v2279
        %2371 = vadd.xlane.f32.xlu0 %v2370
        %v2372 = vpop.xlane.xlu0 %2371
        %v2373 = vadd.f32 %v2280, %v2281
        %2374 = vadd.xlane.f32.xlu0 %v2373
        %v2375 = vpop.xlane.xlu0 %2374
        %v2376 = vadd.f32 %v2282, %v2283
        %2377 = vadd.xlane.f32.xlu0 %v2376
        %v2378 = vpop.xlane.xlu0 %2377
        %v2379 = vadd.f32 %v2284, %v2285
        %2380 = vadd.xlane.f32.xlu0 %v2379
        %v2381 = vpop.xlane.xlu0 %2380
        %v2382 = vmul.f32 %v2288, %v2125
        %v2383 = vmul.f32 %v2291, %v2125
        %v2384 = vmul.f32 %v2294, %v2125
        %v2385 = vmul.f32 %v2297, %v2125
        %v2386 = vmul.f32 %v2300, %v2125
        %v2387 = vmul.f32 %v2303, %v2125
        %v2388 = vmul.f32 %v2306, %v2125
        %v2389 = vmul.f32 %v2309, %v2125
        %v2390 = vmul.f32 %v2312, %v2125
        %v2391 = vmul.f32 %v2315, %v2125
        %v2392 = vmul.f32 %v2318, %v2125
        %v2393 = vmul.f32 %v2321, %v2125
        %v2394 = vmul.f32 %v2324, %v2125
        %v2395 = vmul.f32 %v2327, %v2125
        %v2396 = vmul.f32 %v2330, %v2125
        %v2397 = vmul.f32 %v2333, %v2125
        %v2398 = vmul.f32 %v2336, %v2125
        %v2399 = vmul.f32 %v2339, %v2125
        %v2400 = vmul.f32 %v2342, %v2125
        %v2401 = vmul.f32 %v2345, %v2125
        %v2402 = vmul.f32 %v2348, %v2125
        %v2403 = vmul.f32 %v2351, %v2125
        %v2404 = vmul.f32 %v2354, %v2125
        %v2405 = vmul.f32 %v2357, %v2125
        %v2406 = vmul.f32 %v2360, %v2125
        %v2407 = vmul.f32 %v2363, %v2125
        %v2408 = vmul.f32 %v2366, %v2125
        %v2409 = vmul.f32 %v2369, %v2125
        %v2410 = vmul.f32 %v2372, %v2125
        %v2411 = vmul.f32 %v2375, %v2125
        %v2412 = vmul.f32 %v2378, %v2125
        %v2413 = vmul.f32 %v2381, %v2125
        %v2414 = vadd.f32 %v2382, 1e-05
        %v2415 = vadd.f32 %v2383, 1e-05
        %v2416 = vadd.f32 %v2384, 1e-05
        %v2417 = vadd.f32 %v2385, 1e-05
        %v2418 = vadd.f32 %v2386, 1e-05
        %v2419 = vadd.f32 %v2387, 1e-05
        %v2420 = vadd.f32 %v2388, 1e-05
        %v2421 = vadd.f32 %v2389, 1e-05
        %v2422 = vadd.f32 %v2390, 1e-05
        %v2423 = vadd.f32 %v2391, 1e-05
        %v2424 = vadd.f32 %v2392, 1e-05
        %v2425 = vadd.f32 %v2393, 1e-05
        %v2426 = vadd.f32 %v2394, 1e-05
        %v2427 = vadd.f32 %v2395, 1e-05
        %v2428 = vadd.f32 %v2396, 1e-05
        %v2429 = vadd.f32 %v2397, 1e-05
        %v2430 = vadd.f32 %v2398, 1e-05
        %v2431 = vadd.f32 %v2399, 1e-05
        %v2432 = vadd.f32 %v2400, 1e-05
        %v2433 = vadd.f32 %v2401, 1e-05
        %v2434 = vadd.f32 %v2402, 1e-05
        %v2435 = vadd.f32 %v2403, 1e-05
        %v2436 = vadd.f32 %v2404, 1e-05
        %v2437 = vadd.f32 %v2405, 1e-05
        %v2438 = vadd.f32 %v2406, 1e-05
        %v2439 = vadd.f32 %v2407, 1e-05
        %v2440 = vadd.f32 %v2408, 1e-05
        %v2441 = vadd.f32 %v2409, 1e-05
        %v2442 = vadd.f32 %v2410, 1e-05
        %v2443 = vadd.f32 %v2411, 1e-05
        %v2444 = vadd.f32 %v2412, 1e-05
        %v2445 = vadd.f32 %v2413, 1e-05
        %v2446 = vrsqrt.pop %v2414
        %v2447 = vrsqrt.pop %v2415
        %v2448 = vrsqrt.pop %v2416
        %v2449 = vrsqrt.pop %v2417
        %v2450 = vrsqrt.pop %v2418
        %v2451 = vrsqrt.pop %v2419
        %v2452 = vrsqrt.pop %v2420
        %v2453 = vrsqrt.pop %v2421
        %v2454 = vrsqrt.pop %v2422
        %v2455 = vrsqrt.pop %v2423
        %v2456 = vrsqrt.pop %v2424
        %v2457 = vrsqrt.pop %v2425
        %v2458 = vrsqrt.pop %v2426
        %v2459 = vrsqrt.pop %v2427
        %v2460 = vrsqrt.pop %v2428
        %v2461 = vrsqrt.pop %v2429
        %v2462 = vrsqrt.pop %v2430
        %v2463 = vrsqrt.pop %v2431
        %v2464 = vrsqrt.pop %v2432
        %v2465 = vrsqrt.pop %v2433
        %v2466 = vrsqrt.pop %v2434
        %v2467 = vrsqrt.pop %v2435
        %v2468 = vrsqrt.pop %v2436
        %v2469 = vrsqrt.pop %v2437
        %v2470 = vrsqrt.pop %v2438
        %v2471 = vrsqrt.pop %v2439
        %v2472 = vrsqrt.pop %v2440
        %v2473 = vrsqrt.pop %v2441
        %v2474 = vrsqrt.pop %v2442
        %v2475 = vrsqrt.pop %v2443
        %v2476 = vrsqrt.pop %v2444
        %v2477 = vrsqrt.pop %v2445
        %v2478 = vld [vmem:[#allocation10] sm:$0x3]
        %v2480 = vlaneseq
        %v2481 = vshrl.u32 %v2480, 7
        %v2482 = vsub.s32 0, %v2481
        %v2483 = vrot.slane %v2478, %v2482
        %v2484 = vlaneseq
        %v2485 = vshrl.u32 %v2484, 7
        %v2486 = vsub.s32 1, %v2485
        %v2487 = vrot.slane %v2478, %v2486
        %v2490 = vmul.f32 %v2126, %v2483
        %v2491 = vmul.f32 %v2126, %v2487
        %v2492 = vmul.f32 %v2127, %v2483
        %v2493 = vmul.f32 %v2127, %v2487
        %v2494 = vmul.f32 %v2128, %v2483
        %v2495 = vmul.f32 %v2128, %v2487
        %v2496 = vmul.f32 %v2129, %v2483
        %v2497 = vmul.f32 %v2129, %v2487
        %v2498 = vmul.f32 %v2130, %v2483
        %v2499 = vmul.f32 %v2130, %v2487
        %v2500 = vmul.f32 %v2131, %v2483
        %v2501 = vmul.f32 %v2131, %v2487
        %v2502 = vmul.f32 %v2132, %v2483
        %v2503 = vmul.f32 %v2132, %v2487
        %v2504 = vmul.f32 %v2133, %v2483
        %v2505 = vmul.f32 %v2133, %v2487
        %v2506 = vmul.f32 %v2134, %v2483
        %v2507 = vmul.f32 %v2134, %v2487
        %v2508 = vmul.f32 %v2135, %v2483
        %v2509 = vmul.f32 %v2135, %v2487
        %v2510 = vmul.f32 %v2136, %v2483
        %v2511 = vmul.f32 %v2136, %v2487
        %v2512 = vmul.f32 %v2137, %v2483
        %v2513 = vmul.f32 %v2137, %v2487
        %v2514 = vmul.f32 %v2138, %v2483
        %v2515 = vmul.f32 %v2138, %v2487
        %v2516 = vmul.f32 %v2139, %v2483
        %v2517 = vmul.f32 %v2139, %v2487
        %v2518 = vmul.f32 %v2140, %v2483
        %v2519 = vmul.f32 %v2140, %v2487
        %v2520 = vmul.f32 %v2141, %v2483
        %v2521 = vmul.f32 %v2141, %v2487
        %v2522 = vmul.f32 %v2142, %v2483
        %v2523 = vmul.f32 %v2142, %v2487
        %v2524 = vmul.f32 %v2143, %v2483
        %v2525 = vmul.f32 %v2143, %v2487
        %v2526 = vmul.f32 %v2144, %v2483
        %v2527 = vmul.f32 %v2144, %v2487
        %v2528 = vmul.f32 %v2145, %v2483
        %v2529 = vmul.f32 %v2145, %v2487
        %v2530 = vmul.f32 %v2146, %v2483
        %v2531 = vmul.f32 %v2146, %v2487
        %v2532 = vmul.f32 %v2147, %v2483
        %v2533 = vmul.f32 %v2147, %v2487
        %v2534 = vmul.f32 %v2148, %v2483
        %v2535 = vmul.f32 %v2148, %v2487
        %v2536 = vmul.f32 %v2149, %v2483
        %v2537 = vmul.f32 %v2149, %v2487
        %v2538 = vmul.f32 %v2150, %v2483
        %v2539 = vmul.f32 %v2150, %v2487
        %v2540 = vmul.f32 %v2151, %v2483
        %v2541 = vmul.f32 %v2151, %v2487
        %v2542 = vmul.f32 %v2152, %v2483
        %v2543 = vmul.f32 %v2152, %v2487
        %v2544 = vmul.f32 %v2153, %v2483
        %v2545 = vmul.f32 %v2153, %v2487
        %v2546 = vmul.f32 %v2154, %v2483
        %v2547 = vmul.f32 %v2154, %v2487
        %v2548 = vmul.f32 %v2155, %v2483
        %v2549 = vmul.f32 %v2155, %v2487
        %v2550 = vmul.f32 %v2156, %v2483
        %v2551 = vmul.f32 %v2156, %v2487
        %v2552 = vmul.f32 %v2157, %v2483
        %v2553 = vmul.f32 %v2157, %v2487
        %v2554 = vsub.f32 %v1871, %v2490
        %v2555 = vsub.f32 %v1873, %v2491
        %v2556 = vsub.f32 %v1875, %v2492
        %v2557 = vsub.f32 %v1877, %v2493
        %v2558 = vsub.f32 %v1881, %v2494
        %v2559 = vsub.f32 %v1883, %v2495
        %v2560 = vsub.f32 %v1885, %v2496
        %v2561 = vsub.f32 %v1887, %v2497
        %v2562 = vsub.f32 %v1891, %v2498
        %v2563 = vsub.f32 %v1893, %v2499
        %v2564 = vsub.f32 %v1895, %v2500
        %v2565 = vsub.f32 %v1897, %v2501
        %v2566 = vsub.f32 %v1901, %v2502
        %v2567 = vsub.f32 %v1903, %v2503
        %v2568 = vsub.f32 %v1905, %v2504
        %v2569 = vsub.f32 %v1907, %v2505
        %v2570 = vsub.f32 %v1911, %v2506
        %v2571 = vsub.f32 %v1913, %v2507
        %v2572 = vsub.f32 %v1915, %v2508
        %v2573 = vsub.f32 %v1917, %v2509
        %v2574 = vsub.f32 %v1921, %v2510
        %v2575 = vsub.f32 %v1923, %v2511
        %v2576 = vsub.f32 %v1925, %v2512
        %v2577 = vsub.f32 %v1927, %v2513
        %v2578 = vsub.f32 %v1931, %v2514
        %v2579 = vsub.f32 %v1933, %v2515
        %v2580 = vsub.f32 %v1935, %v2516
        %v2581 = vsub.f32 %v1937, %v2517
        %v2582 = vsub.f32 %v1941, %v2518
        %v2583 = vsub.f32 %v1943, %v2519
        %v2584 = vsub.f32 %v1945, %v2520
        %v2585 = vsub.f32 %v1947, %v2521
        %v2586 = vsub.f32 %v1951, %v2522
        %v2587 = vsub.f32 %v1953, %v2523
        %v2588 = vsub.f32 %v1955, %v2524
        %v2589 = vsub.f32 %v1957, %v2525
        %v2590 = vsub.f32 %v1961, %v2526
        %v2591 = vsub.f32 %v1963, %v2527
        %v2592 = vsub.f32 %v1965, %v2528
        %v2593 = vsub.f32 %v1967, %v2529
        %v2594 = vsub.f32 %v1971, %v2530
        %v2595 = vsub.f32 %v1973, %v2531
        %v2596 = vsub.f32 %v1975, %v2532
        %v2597 = vsub.f32 %v1977, %v2533
        %v2598 = vsub.f32 %v1981, %v2534
        %v2599 = vsub.f32 %v1983, %v2535
        %v2600 = vsub.f32 %v1985, %v2536
        %v2601 = vsub.f32 %v1987, %v2537
        %v2602 = vsub.f32 %v1991, %v2538
        %v2603 = vsub.f32 %v1993, %v2539
        %v2604 = vsub.f32 %v1995, %v2540
        %v2605 = vsub.f32 %v1997, %v2541
        %v2606 = vsub.f32 %v2001, %v2542
        %v2607 = vsub.f32 %v2003, %v2543
        %v2608 = vsub.f32 %v2005, %v2544
        %v2609 = vsub.f32 %v2007, %v2545
        %v2610 = vsub.f32 %v2011, %v2546
        %v2611 = vsub.f32 %v2013, %v2547
        %v2612 = vsub.f32 %v2015, %v2548
        %v2613 = vsub.f32 %v2017, %v2549
        %v2614 = vsub.f32 %v2021, %v2550
        %v2615 = vsub.f32 %v2023, %v2551
        %v2616 = vsub.f32 %v2025, %v2552
        %v2617 = vsub.f32 %v2027, %v2553
        %v2618 = vmul.f32 %v2446, %v2554
        %v2619 = vmul.f32 %v2446, %v2555
        %v2620 = vmul.f32 %v2447, %v2556
        %v2621 = vmul.f32 %v2447, %v2557
        %v2622 = vmul.f32 %v2448, %v2558
        %v2623 = vmul.f32 %v2448, %v2559
        %v2624 = vmul.f32 %v2449, %v2560
        %v2625 = vmul.f32 %v2449, %v2561
        %v2626 = vmul.f32 %v2450, %v2562
        %v2627 = vmul.f32 %v2450, %v2563
        %v2628 = vmul.f32 %v2451, %v2564
        %v2629 = vmul.f32 %v2451, %v2565
        %v2630 = vmul.f32 %v2452, %v2566
        %v2631 = vmul.f32 %v2452, %v2567
        %v2632 = vmul.f32 %v2453, %v2568
        %v2633 = vmul.f32 %v2453, %v2569
        %v2634 = vmul.f32 %v2454, %v2570
        %v2635 = vmul.f32 %v2454, %v2571
        %v2636 = vmul.f32 %v2455, %v2572
        %v2637 = vmul.f32 %v2455, %v2573
        %v2638 = vmul.f32 %v2456, %v2574
        %v2639 = vmul.f32 %v2456, %v2575
        %v2640 = vmul.f32 %v2457, %v2576
        %v2641 = vmul.f32 %v2457, %v2577
        %v2642 = vmul.f32 %v2458, %v2578
        %v2643 = vmul.f32 %v2458, %v2579
        %v2644 = vmul.f32 %v2459, %v2580
        %v2645 = vmul.f32 %v2459, %v2581
        %v2646 = vmul.f32 %v2460, %v2582
        %v2647 = vmul.f32 %v2460, %v2583
        %v2648 = vmul.f32 %v2461, %v2584
        %v2649 = vmul.f32 %v2461, %v2585
        %v2650 = vmul.f32 %v2462, %v2586
        %v2651 = vmul.f32 %v2462, %v2587
        %v2652 = vmul.f32 %v2463, %v2588
        %v2653 = vmul.f32 %v2463, %v2589
        %v2654 = vmul.f32 %v2464, %v2590
        %v2655 = vmul.f32 %v2464, %v2591
        %v2656 = vmul.f32 %v2465, %v2592
        %v2657 = vmul.f32 %v2465, %v2593
        %v2658 = vmul.f32 %v2466, %v2594
        %v2659 = vmul.f32 %v2466, %v2595
        %v2660 = vmul.f32 %v2467, %v2596
        %v2661 = vmul.f32 %v2467, %v2597
        %v2662 = vmul.f32 %v2468, %v2598
        %v2663 = vmul.f32 %v2468, %v2599
        %v2664 = vmul.f32 %v2469, %v2600
        %v2665 = vmul.f32 %v2469, %v2601
        %v2666 = vmul.f32 %v2470, %v2602
        %v2667 = vmul.f32 %v2470, %v2603
        %v2668 = vmul.f32 %v2471, %v2604
        %v2669 = vmul.f32 %v2471, %v2605
        %v2670 = vmul.f32 %v2472, %v2606
        %v2671 = vmul.f32 %v2472, %v2607
        %v2672 = vmul.f32 %v2473, %v2608
        %v2673 = vmul.f32 %v2473, %v2609
        %v2674 = vmul.f32 %v2474, %v2610
        %v2675 = vmul.f32 %v2474, %v2611
        %v2676 = vmul.f32 %v2475, %v2612
        %v2677 = vmul.f32 %v2475, %v2613
        %v2678 = vmul.f32 %v2476, %v2614
        %v2679 = vmul.f32 %v2476, %v2615
        %v2680 = vmul.f32 %v2477, %v2616
        %v2681 = vmul.f32 %v2477, %v2617
        %v2682 = vmax.f32 %v2618, 0.0
        %v2683 = vmax.f32 %v2619, 0.0
        %v2684 = vmax.f32 %v2620, 0.0
        %v2685 = vmax.f32 %v2621, 0.0
        %v2686 = vmax.f32 %v2622, 0.0
        %v2687 = vmax.f32 %v2623, 0.0
        %v2688 = vmax.f32 %v2624, 0.0
        %v2689 = vmax.f32 %v2625, 0.0
        %v2690 = vmax.f32 %v2626, 0.0
        %v2691 = vmax.f32 %v2627, 0.0
        %v2692 = vmax.f32 %v2628, 0.0
        %v2693 = vmax.f32 %v2629, 0.0
        %v2694 = vmax.f32 %v2630, 0.0
        %v2695 = vmax.f32 %v2631, 0.0
        %v2696 = vmax.f32 %v2632, 0.0
        %v2697 = vmax.f32 %v2633, 0.0
        %v2698 = vmax.f32 %v2634, 0.0
        %v2699 = vmax.f32 %v2635, 0.0
        %v2700 = vmax.f32 %v2636, 0.0
        %v2701 = vmax.f32 %v2637, 0.0
        %v2702 = vmax.f32 %v2638, 0.0
        %v2703 = vmax.f32 %v2639, 0.0
        %v2704 = vmax.f32 %v2640, 0.0
        %v2705 = vmax.f32 %v2641, 0.0
        %v2706 = vmax.f32 %v2642, 0.0
        %v2707 = vmax.f32 %v2643, 0.0
        %v2708 = vmax.f32 %v2644, 0.0
        %v2709 = vmax.f32 %v2645, 0.0
        %v2710 = vmax.f32 %v2646, 0.0
        %v2711 = vmax.f32 %v2647, 0.0
        %v2712 = vmax.f32 %v2648, 0.0
        %v2713 = vmax.f32 %v2649, 0.0
        %v2714 = vmax.f32 %v2650, 0.0
        %v2715 = vmax.f32 %v2651, 0.0
        %v2716 = vmax.f32 %v2652, 0.0
        %v2717 = vmax.f32 %v2653, 0.0
        %v2718 = vmax.f32 %v2654, 0.0
        %v2719 = vmax.f32 %v2655, 0.0
        %v2720 = vmax.f32 %v2656, 0.0
        %v2721 = vmax.f32 %v2657, 0.0
        %v2722 = vmax.f32 %v2658, 0.0
        %v2723 = vmax.f32 %v2659, 0.0
        %v2724 = vmax.f32 %v2660, 0.0
        %v2725 = vmax.f32 %v2661, 0.0
        %v2726 = vmax.f32 %v2662, 0.0
        %v2727 = vmax.f32 %v2663, 0.0
        %v2728 = vmax.f32 %v2664, 0.0
        %v2729 = vmax.f32 %v2665, 0.0
        %v2730 = vmax.f32 %v2666, 0.0
        %v2731 = vmax.f32 %v2667, 0.0
        %v2732 = vmax.f32 %v2668, 0.0
        %v2733 = vmax.f32 %v2669, 0.0
        %v2734 = vmax.f32 %v2670, 0.0
        %v2735 = vmax.f32 %v2671, 0.0
        %v2736 = vmax.f32 %v2672, 0.0
        %v2737 = vmax.f32 %v2673, 0.0
        %v2738 = vmax.f32 %v2674, 0.0
        %v2739 = vmax.f32 %v2675, 0.0
        %v2740 = vmax.f32 %v2676, 0.0
        %v2741 = vmax.f32 %v2677, 0.0
        %v2742 = vmax.f32 %v2678, 0.0
        %v2743 = vmax.f32 %v2679, 0.0
        %v2744 = vmax.f32 %v2680, 0.0
        %v2745 = vmax.f32 %v2681, 0.0
        %v2746 = vld [vmem:[%s306] sm:$0xff]
        %v2747 = vld [vmem:[%s306 + $0x8] sm:$0xff]
        %v2748 = vld [vmem:[%s306 + $0x10] sm:$0xff]
        %v2749 = vld [vmem:[%s306 + $0x18] sm:$0xff]
        %v2750 = vld [vmem:[%s306 + $0x20] sm:$0xff]
        %v2751 = vld [vmem:[%s306 + $0x28] sm:$0xff]
        %v2752 = vld [vmem:[%s306 + $0x30] sm:$0xff]
        %v2753 = vld [vmem:[%s306 + $0x38] sm:$0xff]
        %v2754 = vld [vmem:[%s306 + $0x40] sm:$0xff]
        %v2755 = vld [vmem:[%s306 + $0x48] sm:$0xff]
        %v2756 = vld [vmem:[%s306 + $0x50] sm:$0xff]
        %v2757 = vld [vmem:[%s306 + $0x58] sm:$0xff]
        %v2758 = vld [vmem:[%s306 + $0x60] sm:$0xff]
        %v2759 = vld [vmem:[%s306 + $0x68] sm:$0xff]
        %v2760 = vld [vmem:[%s306 + $0x70] sm:$0xff]
        %v2761 = vld [vmem:[%s306 + $0x78] sm:$0xff]
        %v2762 = vld [vmem:[%s306 + $0x80] sm:$0xff]
        %v2763 = vld [vmem:[%s306 + $0x88] sm:$0xff]
        %v2764 = vld [vmem:[%s306 + $0x90] sm:$0xff]
        %v2765 = vld [vmem:[%s306 + $0x98] sm:$0xff]
        %v2766 = vld [vmem:[%s306 + $0xa0] sm:$0xff]
        %v2767 = vld [vmem:[%s306 + $0xa8] sm:$0xff]
        %v2768 = vld [vmem:[%s306 + $0xb0] sm:$0xff]
        %v2769 = vld [vmem:[%s306 + $0xb8] sm:$0xff]
        %v2770 = vld [vmem:[%s306 + $0xc0] sm:$0xff]
        %v2771 = vld [vmem:[%s306 + $0xc8] sm:$0xff]
        %v2772 = vld [vmem:[%s306 + $0xd0] sm:$0xff]
        %v2773 = vld [vmem:[%s306 + $0xd8] sm:$0xff]
        %v2774 = vld [vmem:[%s306 + $0xe0] sm:$0xff]
        %v2775 = vld [vmem:[%s306 + $0xe8] sm:$0xff]
        %v2776 = vld [vmem:[%s306 + $0xf0] sm:$0xff]
        %v2777 = vld [vmem:[%s306 + $0xf8] sm:$0xff]
        %2778 = vst [vmem:[%s359] sm:$0xff] %v2746
        %2779 = vst [vmem:[%s359 + $0x18] sm:$0xff] %v2747
        %2780 = vst [vmem:[%s359 + $0x30] sm:$0xff] %v2748
        %2781 = vst [vmem:[%s359 + $0x48] sm:$0xff] %v2749
        %2782 = vst [vmem:[%s359 + $0x60] sm:$0xff] %v2750
        %2783 = vst [vmem:[%s359 + $0x78] sm:$0xff] %v2751
        %2784 = vst [vmem:[%s359 + $0x90] sm:$0xff] %v2752
        %2785 = vst [vmem:[%s359 + $0xa8] sm:$0xff] %v2753
        %2786 = vst [vmem:[%s359 + $0xc0] sm:$0xff] %v2754
        %2787 = vst [vmem:[%s359 + $0xd8] sm:$0xff] %v2755
        %2788 = vst [vmem:[%s359 + $0xf0] sm:$0xff] %v2756
        %2789 = vst [vmem:[%s359 + $0x108] sm:$0xff] %v2757
        %2790 = vst [vmem:[%s359 + $0x120] sm:$0xff] %v2758
        %2791 = vst [vmem:[%s359 + $0x138] sm:$0xff] %v2759
        %2792 = vst [vmem:[%s359 + $0x150] sm:$0xff] %v2760
        %2793 = vst [vmem:[%s359 + $0x168] sm:$0xff] %v2761
        %2794 = vst [vmem:[%s359 + $0x180] sm:$0xff] %v2762
        %2795 = vst [vmem:[%s359 + $0x198] sm:$0xff] %v2763
        %2796 = vst [vmem:[%s359 + $0x1b0] sm:$0xff] %v2764
        %2797 = vst [vmem:[%s359 + $0x1c8] sm:$0xff] %v2765
        %2798 = vst [vmem:[%s359 + $0x1e0] sm:$0xff] %v2766
        %2799 = vst [vmem:[%s359 + $0x1f8] sm:$0xff] %v2767
        %2800 = vst [vmem:[%s359 + $0x210] sm:$0xff] %v2768
        %2801 = vst [vmem:[%s359 + $0x228] sm:$0xff] %v2769
        %2802 = vst [vmem:[%s359 + $0x240] sm:$0xff] %v2770
        %2803 = vst [vmem:[%s359 + $0x258] sm:$0xff] %v2771
        %2804 = vst [vmem:[%s359 + $0x270] sm:$0xff] %v2772
        %2805 = vst [vmem:[%s359 + $0x288] sm:$0xff] %v2773
        %2806 = vst [vmem:[%s359 + $0x2a0] sm:$0xff] %v2774
        %2807 = vst [vmem:[%s359 + $0x2b8] sm:$0xff] %v2775
        %2808 = vst [vmem:[%s359 + $0x2d0] sm:$0xff] %v2776
        %2809 = vst [vmem:[%s359 + $0x2e8] sm:$0xff] %v2777
        %2810 = vst [vmem:[%s359 + $0x8] sm:$0xff] %v2682
        %2811 = vst [vmem:[%s359 + $0x10] sm:$0xff] %v2683
        %2812 = vst [vmem:[%s359 + $0x20] sm:$0xff] %v2684
        %2813 = vst [vmem:[%s359 + $0x28] sm:$0xff] %v2685
        %2814 = vst [vmem:[%s359 + $0x38] sm:$0xff] %v2686
        %2815 = vst [vmem:[%s359 + $0x40] sm:$0xff] %v2687
        %2816 = vst [vmem:[%s359 + $0x50] sm:$0xff] %v2688
        %2817 = vst [vmem:[%s359 + $0x58] sm:$0xff] %v2689
        %2818 = vst [vmem:[%s359 + $0x68] sm:$0xff] %v2690
        %2819 = vst [vmem:[%s359 + $0x70] sm:$0xff] %v2691
        %2820 = vst [vmem:[%s359 + $0x80] sm:$0xff] %v2692
        %2821 = vst [vmem:[%s359 + $0x88] sm:$0xff] %v2693
        %2822 = vst [vmem:[%s359 + $0x98] sm:$0xff] %v2694
        %2823 = vst [vmem:[%s359 + $0xa0] sm:$0xff] %v2695
        %2824 = vst [vmem:[%s359 + $0xb0] sm:$0xff] %v2696
        %2825 = vst [vmem:[%s359 + $0xb8] sm:$0xff] %v2697
        %2826 = vst [vmem:[%s359 + $0xc8] sm:$0xff] %v2698
        %2827 = vst [vmem:[%s359 + $0xd0] sm:$0xff] %v2699
        %2828 = vst [vmem:[%s359 + $0xe0] sm:$0xff] %v2700
        %2829 = vst [vmem:[%s359 + $0xe8] sm:$0xff] %v2701
        %2830 = vst [vmem:[%s359 + $0xf8] sm:$0xff] %v2702
        %2831 = vst [vmem:[%s359 + $0x100] sm:$0xff] %v2703
        %2832 = vst [vmem:[%s359 + $0x110] sm:$0xff] %v2704
        %2833 = vst [vmem:[%s359 + $0x118] sm:$0xff] %v2705
        %2834 = vst [vmem:[%s359 + $0x128] sm:$0xff] %v2706
        %2835 = vst [vmem:[%s359 + $0x130] sm:$0xff] %v2707
        %2836 = vst [vmem:[%s359 + $0x140] sm:$0xff] %v2708
        %2837 = vst [vmem:[%s359 + $0x148] sm:$0xff] %v2709
        %2838 = vst [vmem:[%s359 + $0x158] sm:$0xff] %v2710
        %2839 = vst [vmem:[%s359 + $0x160] sm:$0xff] %v2711
        %2840 = vst [vmem:[%s359 + $0x170] sm:$0xff] %v2712
        %2841 = vst [vmem:[%s359 + $0x178] sm:$0xff] %v2713
        %2842 = vst [vmem:[%s359 + $0x188] sm:$0xff] %v2714
        %2843 = vst [vmem:[%s359 + $0x190] sm:$0xff] %v2715
        %2844 = vst [vmem:[%s359 + $0x1a0] sm:$0xff] %v2716
        %2845 = vst [vmem:[%s359 + $0x1a8] sm:$0xff] %v2717
        %2846 = vst [vmem:[%s359 + $0x1b8] sm:$0xff] %v2718
        %2847 = vst [vmem:[%s359 + $0x1c0] sm:$0xff] %v2719
        %2848 = vst [vmem:[%s359 + $0x1d0] sm:$0xff] %v2720
        %2849 = vst [vmem:[%s359 + $0x1d8] sm:$0xff] %v2721
        %2850 = vst [vmem:[%s359 + $0x1e8] sm:$0xff] %v2722
        %2851 = vst [vmem:[%s359 + $0x1f0] sm:$0xff] %v2723
        %2852 = vst [vmem:[%s359 + $0x200] sm:$0xff] %v2724
        %2853 = vst [vmem:[%s359 + $0x208] sm:$0xff] %v2725
        %2854 = vst [vmem:[%s359 + $0x218] sm:$0xff] %v2726
        %2855 = vst [vmem:[%s359 + $0x220] sm:$0xff] %v2727
        %2856 = vst [vmem:[%s359 + $0x230] sm:$0xff] %v2728
        %2857 = vst [vmem:[%s359 + $0x238] sm:$0xff] %v2729
        %2858 = vst [vmem:[%s359 + $0x248] sm:$0xff] %v2730
        %2859 = vst [vmem:[%s359 + $0x250] sm:$0xff] %v2731
        %2860 = vst [vmem:[%s359 + $0x260] sm:$0xff] %v2732
        %2861 = vst [vmem:[%s359 + $0x268] sm:$0xff] %v2733
        %2862 = vst [vmem:[%s359 + $0x278] sm:$0xff] %v2734
        %2863 = vst [vmem:[%s359 + $0x280] sm:$0xff] %v2735
        %2864 = vst [vmem:[%s359 + $0x290] sm:$0xff] %v2736
        %2865 = vst [vmem:[%s359 + $0x298] sm:$0xff] %v2737
        %2866 = vst [vmem:[%s359 + $0x2a8] sm:$0xff] %v2738
        %2867 = vst [vmem:[%s359 + $0x2b0] sm:$0xff] %v2739
        %2868 = vst [vmem:[%s359 + $0x2c0] sm:$0xff] %v2740
        %2869 = vst [vmem:[%s359 + $0x2c8] sm:$0xff] %v2741
        %2870 = vst [vmem:[%s359 + $0x2d8] sm:$0xff] %v2742
        %2871 = vst [vmem:[%s359 + $0x2e0] sm:$0xff] %v2743
        %2872 = vst [vmem:[%s359 + $0x2f0] sm:$0xff] %v2744
        %2873 = vst [vmem:[%s359 + $0x2f8] sm:$0xff] %v2745
        %s2874 = sand.u32 %s169, 1
        %s2875 = scalar_lea.sflag [#allocation4], %s2874
        %s2876 = sand.u32 %s169, 1
        %s2877 = smul.addr %s2876, 768
        %s2878 = scalar_lea.vmem [#allocation11], %s2877
        // Predicated region
        $region65: #{tpu_custom_call.1} parent=43 // pred_check
          %p2879 = pneg %p179
        $region66: #{tpu_custom_call.1} parent=43 // pred_check_branch
          %2881 = sbr.rel (%p2879) target = $region68
        $region67: #{tpu_custom_call.1} parent=43 // pred_region
          %s2882 = smul.u32 32, %s25
          %s2883 = ssub.s32 125, %s2882
          %p2884 = scmp.lt.s32.totalorder %s2883, 32
          %s2885 = scalar_select %p2884, %s2883, 32
          %s2886 = smul.u32 128, %s2885
          %s2887 = smul.u32 %s2886, 3
          %s2889 = ssub.s32 12288, %s2887
          %2890 = vsyncadd %s2875, %s2889
          %p2891 = scmp.ne.s32.totalorder 0, %s2887
          %s2892 = smul.addr %s2882, 3
          %s2893 = smul.addr %s2892, 128
          %s2894 = scalar_lea.hbm %s6, %s2893
          %s2895 = smul.u32 24, %s2885
          %s2896 = sshll.u32 %s2878, 4
          %s2897 = int_to_ptr.vmem [resolvable:$true] %s2896
          %s2898 = sshll.u32 %s2895, 4
          %2902 = dma.vmem_to_hbm [thread:$0]  (%p2891), %s2897, %s2898, %s2894, %s2875, 384, 384, 24
        $region68: #{tpu_custom_call.1} parent=43 // pred_fallthru
          _
      $region44: #{tpu_custom_call.1} parent=5 // pred_fallthru
        _
      %p2903 = scmp.le.s32.totalorder 2, %s20
      // Predicated region
      $region69: #{tpu_custom_call.1} parent=5 // pred_check
        %p2904 = pneg %p2903
      $region70: #{tpu_custom_call.1} parent=5 // pred_check_branch
        %2906 = sbr.rel (%p2904) target = $region72
      $region71: #{tpu_custom_call.1} parent=5 // pred_region
        %s2907 = ssub.s32 %s20, 2
        // Predicated region
        $region73: #{tpu_custom_call.1} parent=71 // pred_check
          %p2908 = pneg %p185
        $region74: #{tpu_custom_call.1} parent=71 // pred_check_branch
          %2910 = sbr.rel (%p2908) target = $region76
        $region75: #{tpu_custom_call.1} parent=71 // pred_region
          %s2911 = sand.u32 %s170, 1
          %s2912 = scalar_lea.sflag [#allocation4], %s2911
          %s2913 = sand.u32 %s170, 1
          %s2914 = smul.addr %s2913, 768
          %s2915 = scalar_lea.vmem [#allocation11], %s2914
          %2916 = dma.done %s2912, 12288
        $region76: #{tpu_custom_call.1} parent=71 // pred_fallthru
          _
      $region72: #{tpu_custom_call.1} parent=5 // pred_fallthru
        _
    $region6: #{tpu_custom_call.1} parent=1 // loop_footer
      %s24 = sadd.s32 1, %s20
    $region7: #{tpu_custom_call.1} parent=1 // loop_footer_branch
      %19 = sbr.rel target = $region3
    $region8: #{tpu_custom_call.1} parent=1 // loop_exit
      _
    %2917 = vsyncpa [#allocation3], 1
    %s2918 = scalar_lea.sflag [#allocation3], 1
    %2919 = vsyncpa %s2918, 1
    %2920 = vsyncpa [#allocation6], 1
    %2921 = vsyncpa [#allocation9], 1
    %2922 = vsyncpa [#allocation4], 1
    %s2923 = scalar_lea.sflag [#allocation4], 1
    %2924 = vsyncpa %s2923, 1

</llo_original>
